<compile_context>
chip_gen: v7x
topology: tpu7x:2x2x1
jax: 0.10.0
libtpu: 0.0.40
codegen_flags: <defaults>
</compile_context>

<pallas_src>
import jax
import jax.numpy as jnp
from jax.experimental import pallas as pl
from jax.experimental.pallas import tpu as pltpu

# Small, forward-consistent shapes (module default img_size=50; 16 keeps it small)
IMG_SIZE = 16
F = IMG_SIZE * IMG_SIZE          # flattened image features
H1, H2 = 512, 256
LATENT = 128
LANES = 128
TB_CAP = 512                     # cap batch tile (re-derive lower for img_size=50 on v7x)


def _round_up(x, m):
    return ((x + m - 1) // m) * m


F_PAD = _round_up(F, LANES)      # MXU/lane-aligned feature width (256 here)
ENCVAL_W = LATENT + LANES        # combined encoded+validity output width (256)


def _leaky_relu(x, slope=0.2):
    return jnp.where(x > 0, x, slope * x)


def _dae_kernel(x_ref,
                w1_ref, b1_ref, w2_ref, b2_ref, w3e_ref, b3e_ref,   # encoder (+folded head)
                w4_ref, b4_ref, w5_ref, b5_ref, w6_ref, b6_ref,     # decoder
                encval_ref, dec_ref):
    """One batch tile: 6 MXU matmuls (bf16 in / f32 acc)."""
    bf16 = jnp.bfloat16
    # x arrives f32 via the BlockSpec DMA; cast to bf16 in-register (no wrapper pass).
    x = x_ref[...].astype(bf16)                      # (TB, F_PAD)

    # ---- encoder: Linear(F,512) -> LReLU -> Linear(512,256) -> LReLU -> Linear(256,128+1)
    h = jnp.dot(x, w1_ref[...], preferred_element_type=jnp.float32) + b1_ref[...]
    h = _leaky_relu(h)
    h = jnp.dot(h.astype(bf16), w2_ref[...], preferred_element_type=jnp.float32) + b2_ref[...]
    h = _leaky_relu(h)
    # Layer 3 extended with the folded discriminator head:
    #   cols [0,128) = encoded, col 128 = validity, cols (128,256) = zero padding.
    encval = jnp.dot(h.astype(bf16), w3e_ref[...],
                     preferred_element_type=jnp.float32) + b3e_ref[...]
    encval_ref[...] = encval.astype(encval_ref.dtype)

    enc = encval[:, :LATENT]                         # lane-aligned slice (first 128 lanes)

    # ---- decoder: Linear(128,256) -> LReLU -> Linear(256,512) -> LReLU -> Linear(512,F)
    d = jnp.dot(enc.astype(bf16), w4_ref[...], preferred_element_type=jnp.float32) + b4_ref[...]
    d = _leaky_relu(d)
    d = jnp.dot(d.astype(bf16), w5_ref[...], preferred_element_type=jnp.float32) + b5_ref[...]
    d = _leaky_relu(d)
    d = jnp.dot(d.astype(bf16), w6_ref[...], preferred_element_type=jnp.float32) + b6_ref[...]
    dec_ref[...] = d.astype(dec_ref.dtype)


def init_params(key):
    """Deterministic init mimicking PyTorch Linear default U(-1/sqrt(in), 1/sqrt(in))."""
    layer_dims = [
        (F, H1), (H1, H2), (H2, LATENT),      # encoder
        (LATENT, H2), (H2, H1), (H1, F),      # decoder
        (LATENT, 1),                          # discriminator
    ]
    params = []
    for din, dout in layer_dims:
        key, kw, kb = jax.random.split(key, 3)
        bound = 1.0 / (din ** 0.5)
        w = jax.random.uniform(kw, (din, dout), jnp.float32, -bound, bound)
        b = jax.random.uniform(kb, (1, dout), jnp.float32, -bound, bound)
        params.extend([w, b])
    return params


def _prep_params(params):
    """Pad F-sized dims to F_PAD, fold the discriminator head into layer 3, cast to bf16."""
    w1, b1, w2, b2, w3, b3, w4, b4, w5, b5, w6, b6, wd, bd = params
    pad = F_PAD - F
    if pad:
        w1 = jnp.pad(w1, ((0, pad), (0, 0)))          # extra zero input rows
        w6 = jnp.pad(w6, ((0, 0), (0, pad)))          # extra zero output cols (sliced off)
        b6 = jnp.pad(b6, ((0, 0), (0, pad)))

    # Fold validity = (h @ w3 + b3) @ wd + bd  ==>  h @ (w3 @ wd) + (b3 @ wd + bd)
    wd_eff = w3 @ wd                                  # (H2, 1)  f32
    bd_eff = b3 @ wd + bd                             # (1, 1)   f32
    zpad_w = jnp.zeros((H2, LANES - 1), jnp.float32)
    zpad_b = jnp.zeros((1, LANES - 1), jnp.float32)
    w3e = jnp.concatenate([w3, wd_eff, zpad_w], axis=1)   # (H2, 256)
    b3e = jnp.concatenate([b3, bd_eff, zpad_b], axis=1)   # (1, 256)

    bf = jnp.bfloat16
    return (w1.astype(bf), b1, w2.astype(bf), b2, w3e.astype(bf), b3e,
            w4.astype(bf), b4, w5.astype(bf), b5, w6.astype(bf), b6)


@jax.jit
def discriminator_with_autoencoder(img, params):
    B = img.shape[0]
    x = img.reshape(B, -1).astype(jnp.float32)        # == img.view(B, -1); stays f32
    if F_PAD != F:
        x = jnp.pad(x, ((0, 0), (0, F_PAD - F)))

    # Tile selection: >= 2 tiles when the batch is big enough (v7x megacore),
    # TB derived from the tile count so batch padding waste is < 8 rows/tile,
    # capped at TB_CAP (VMEM + pipeline sweet spot).
    if B >= 16:
        n_tiles = max(2, pl.cdiv(B, TB_CAP))
    else:
        n_tiles = 1
    TB = _round_up(pl.cdiv(B, n_tiles), 8)
    B_pad = n_tiles * TB
    if B_pad != B:
        x = jnp.pad(x, ((0, B_pad - B), (0, 0)))

    prep = _prep_params(params)

    in_specs = [pl.BlockSpec((TB, F_PAD), lambda i: (i, 0))]             # batch-tiled x (f32)
    in_specs += [pl.BlockSpec(p.shape, lambda i: (0, 0)) for p in prep]  # resident params

    # Advisory cost hint for XLA scheduling around the custom call.
    flops = 2 * B_pad * (F_PAD * H1 + H1 * H2 + H2 * ENCVAL_W
                         + LATENT * H2 + H2 * H1 + H1 * F_PAD)
    weight_bytes = sum(int(p.size) * p.dtype.itemsize for p in prep)
    bytes_accessed = (B_pad * F_PAD * 4                # x read (f32)
                      + weight_bytes                   # weights/biases
                      + B_pad * ENCVAL_W * 4           # encoded+validity writeback
                      + B_pad * F_PAD * 4)             # decoded writeback

    encval, dec_pad = pl.pallas_call(
        _dae_kernel,
        grid=(n_tiles,),
        out_shape=(
            jax.ShapeDtypeStruct((B_pad, ENCVAL_W), jnp.float32),   # [encoded | validity | 0]
            jax.ShapeDtypeStruct((B_pad, F_PAD), jnp.float32),      # decoded (F-padded)
        ),
        in_specs=in_specs,
        out_specs=(
            pl.BlockSpec((TB, ENCVAL_W), lambda i: (i, 0)),
            pl.BlockSpec((TB, F_PAD), lambda i: (i, 0)),
        ),
        compiler_params=pltpu.CompilerParams(
            dimension_semantics=("parallel",)),        # shard batch tiles over v7x's 2 TCs
        cost_estimate=pl.CostEstimate(
            flops=flops, transcendentals=0, bytes_accessed=bytes_accessed),
    )(x, *prep)

    encoded = encval[:B, :LATENT]
    validity = encval[:B, LATENT:LATENT + 1]
    decoded = dec_pad[:B, :F]
    return validity, encoded, decoded


def _ref_forward(img, params):
    """Pure-JAX f32 reference (matches the PyTorch module's math)."""
    w1, b1, w2, b2, w3, b3, w4, b4, w5, b5, w6, b6, wd, bd = params
    x = img.reshape(img.shape[0], -1)
    h = _leaky_relu(x @ w1 + b1)
    h = _leaky_relu(h @ w2 + b2)
    enc = h @ w3 + b3
    d = _leaky_relu(enc @ w4 + b4)
    d = _leaky_relu(d @ w5 + b5)
    dec = d @ w6 + b6
    val = enc @ wd + bd
    return val, enc, dec


def _check(img, params):
    validity, encoded, decoded = discriminator_with_autoencoder(img, params)
    jax.block_until_ready((validity, encoded, decoded))
    B = img.shape[0]
    assert validity.shape == (B, 1)
    assert encoded.shape == (B, LATENT)
    assert decoded.shape == (B, F)
    assert validity.dtype == jnp.float32

    # Loose tolerance: kernel uses bf16 MXU inputs with f32 accumulation.
    rv, re, rd = _ref_forward(img, params)
    assert jnp.allclose(validity, rv, atol=1e-1, rtol=5e-2)
    assert jnp.allclose(encoded, re, atol=1e-1, rtol=5e-2)
    assert jnp.allclose(decoded, rd, atol=1e-1, rtol=5e-2)


if __name__ == "__main__":
    key = jax.random.PRNGKey(0)
    k_params, k_img1, k_img2 = jax.random.split(key, 3)

    params = init_params(k_params)

    # NCHW input, flattened inside the wrapper exactly like img.view(B, -1)
    img_small = jax.random.normal(k_img1, (2, 1, IMG_SIZE, IMG_SIZE), jnp.float32)
    _check(img_small, params)                      # 1-tile grid path

    img_multi = jax.random.normal(k_img2, (20, 1, IMG_SIZE, IMG_SIZE), jnp.float32)
    _check(img_multi, params)                      # 2-tile grid path (v7x both cores)

    print("KERNEL_OK")
</pallas_src>

<mosaic_0001>
module attributes {stable_mosaic.version = 11 : i64} {
  func.func @_dae_kernel(%arg0: i32, %arg1: memref<8x256xf32, #tpu.memory_space<vmem>>, %arg2: memref<256x512xbf16, #tpu.memory_space<vmem>>, %arg3: memref<1x512xf32, #tpu.memory_space<vmem>>, %arg4: memref<512x256xbf16, #tpu.memory_space<vmem>>, %arg5: memref<1x256xf32, #tpu.memory_space<vmem>>, %arg6: memref<256x256xbf16, #tpu.memory_space<vmem>>, %arg7: memref<1x256xf32, #tpu.memory_space<vmem>>, %arg8: memref<128x256xbf16, #tpu.memory_space<vmem>>, %arg9: memref<1x256xf32, #tpu.memory_space<vmem>>, %arg10: memref<256x512xbf16, #tpu.memory_space<vmem>>, %arg11: memref<1x512xf32, #tpu.memory_space<vmem>>, %arg12: memref<512x256xbf16, #tpu.memory_space<vmem>>, %arg13: memref<1x256xf32, #tpu.memory_space<vmem>>, %arg14: memref<8x256xf32, #tpu.memory_space<vmem>>, %arg15: memref<8x256xf32, #tpu.memory_space<vmem>>) attributes {dimension_semantics = [#tpu.dimension_semantics<parallel>], iteration_bounds = array<i64: 1>, scalar_prefetch = 0 : i64, scratch_operands = 0 : i64, tpu.core_type = #tpu.core_type<tc>, window_params = [{transform_indices = @transform_0, window_bounds = array<i64: 8, 256>}, {pipeline_mode = #tpu.pipeline_mode<synchronous>, transform_indices = @transform_1, window_bounds = array<i64: 256, 512>}, {pipeline_mode = #tpu.pipeline_mode<synchronous>, transform_indices = @transform_2, window_bounds = array<i64: 1, 512>}, {pipeline_mode = #tpu.pipeline_mode<synchronous>, transform_indices = @transform_3, window_bounds = array<i64: 512, 256>}, {pipeline_mode = #tpu.pipeline_mode<synchronous>, transform_indices = @transform_4, window_bounds = array<i64: 1, 256>}, {pipeline_mode = #tpu.pipeline_mode<synchronous>, transform_indices = @transform_5, window_bounds = array<i64: 256, 256>}, {pipeline_mode = #tpu.pipeline_mode<synchronous>, transform_indices = @transform_6, window_bounds = array<i64: 1, 256>}, {pipeline_mode = #tpu.pipeline_mode<synchronous>, transform_indices = @transform_7, window_bounds = array<i64: 128, 256>}, {pipeline_mode = #tpu.pipeline_mode<synchronous>, transform_indices = @transform_8, window_bounds = array<i64: 1, 256>}, {pipeline_mode = #tpu.pipeline_mode<synchronous>, transform_indices = @transform_9, window_bounds = array<i64: 256, 512>}, {pipeline_mode = #tpu.pipeline_mode<synchronous>, transform_indices = @transform_10, window_bounds = array<i64: 1, 512>}, {pipeline_mode = #tpu.pipeline_mode<synchronous>, transform_indices = @transform_11, window_bounds = array<i64: 512, 256>}, {pipeline_mode = #tpu.pipeline_mode<synchronous>, transform_indices = @transform_12, window_bounds = array<i64: 1, 256>}, {transform_indices = @transform_13, window_bounds = array<i64: 8, 256>}, {transform_indices = @transform_14, window_bounds = array<i64: 8, 256>}]} {
    %c0 = arith.constant 0 : index
    %c0_0 = arith.constant 0 : index
    %0 = vector.load %arg1[%c0, %c0_0] : memref<8x256xf32, #tpu.memory_space<vmem>>, vector<8x256xf32>
    %1 = arith.truncf %0 : vector<8x256xf32> to vector<8x256xbf16>
    %c0_1 = arith.constant 0 : index
    %c0_2 = arith.constant 0 : index
    %2 = vector.load %arg2[%c0_1, %c0_2] : memref<256x512xbf16, #tpu.memory_space<vmem>>, vector<256x512xbf16>
    %cst = arith.constant dense<0.000000e+00> : vector<8x512xf32>
    %3 = tpu.matmul %1, %2, %cst {dimension_numbers = #tpu.dot_dimension_numbers<[1], [0], [0], [1], [0, 0, 1, 1], [], []>} : vector<8x256xbf16>, vector<256x512xbf16>, vector<8x512xf32> -> vector<8x512xf32>
    %c0_3 = arith.constant 0 : index
    %c0_4 = arith.constant 0 : index
    %4 = vector.load %arg3[%c0_3, %c0_4] : memref<1x512xf32, #tpu.memory_space<vmem>>, vector<1x512xf32>
    %5 = vector.broadcast %4 : vector<1x512xf32> to vector<8x512xf32>
    %6 = arith.addf %3, %5 : vector<8x512xf32>
    %cst_5 = arith.constant 0.000000e+00 : f32
    %7 = vector.broadcast %cst_5 : f32 to vector<8x512xf32>
    %8 = arith.cmpf ogt, %6, %7 : vector<8x512xf32>
    %cst_6 = arith.constant 2.000000e-01 : f32
    %9 = vector.broadcast %cst_6 : f32 to vector<8x512xf32>
    %10 = arith.mulf %9, %6 : vector<8x512xf32>
    %11 = arith.select %8, %6, %10 : vector<8x512xi1>, vector<8x512xf32>
    %12 = arith.truncf %11 : vector<8x512xf32> to vector<8x512xbf16>
    %c0_7 = arith.constant 0 : index
    %c0_8 = arith.constant 0 : index
    %13 = vector.load %arg4[%c0_7, %c0_8] : memref<512x256xbf16, #tpu.memory_space<vmem>>, vector<512x256xbf16>
    %cst_9 = arith.constant dense<0.000000e+00> : vector<8x256xf32>
    %14 = tpu.matmul %12, %13, %cst_9 {dimension_numbers = #tpu.dot_dimension_numbers<[1], [0], [0], [1], [0, 0, 1, 1], [], []>} : vector<8x512xbf16>, vector<512x256xbf16>, vector<8x256xf32> -> vector<8x256xf32>
    %c0_10 = arith.constant 0 : index
    %c0_11 = arith.constant 0 : index
    %15 = vector.load %arg5[%c0_10, %c0_11] : memref<1x256xf32, #tpu.memory_space<vmem>>, vector<1x256xf32>
    %16 = vector.broadcast %15 : vector<1x256xf32> to vector<8x256xf32>
    %17 = arith.addf %14, %16 : vector<8x256xf32>
    %cst_12 = arith.constant 0.000000e+00 : f32
    %18 = vector.broadcast %cst_12 : f32 to vector<8x256xf32>
    %19 = arith.cmpf ogt, %17, %18 : vector<8x256xf32>
    %cst_13 = arith.constant 2.000000e-01 : f32
    %20 = vector.broadcast %cst_13 : f32 to vector<8x256xf32>
    %21 = arith.mulf %20, %17 : vector<8x256xf32>
    %22 = arith.select %19, %17, %21 : vector<8x256xi1>, vector<8x256xf32>
    %23 = arith.truncf %22 : vector<8x256xf32> to vector<8x256xbf16>
    %c0_14 = arith.constant 0 : index
    %c0_15 = arith.constant 0 : index
    %24 = vector.load %arg6[%c0_14, %c0_15] : memref<256x256xbf16, #tpu.memory_space<vmem>>, vector<256x256xbf16>
    %cst_16 = arith.constant dense<0.000000e+00> : vector<8x256xf32>
    %25 = tpu.matmul %23, %24, %cst_16 {dimension_numbers = #tpu.dot_dimension_numbers<[1], [0], [0], [1], [0, 0, 1, 1], [], []>} : vector<8x256xbf16>, vector<256x256xbf16>, vector<8x256xf32> -> vector<8x256xf32>
    %c0_17 = arith.constant 0 : index
    %c0_18 = arith.constant 0 : index
    %26 = vector.load %arg7[%c0_17, %c0_18] : memref<1x256xf32, #tpu.memory_space<vmem>>, vector<1x256xf32>
    %27 = vector.broadcast %26 : vector<1x256xf32> to vector<8x256xf32>
    %28 = arith.addf %25, %27 : vector<8x256xf32>
    %c0_19 = arith.constant 0 : index
    %c0_20 = arith.constant 0 : index
    %29 = vector.load %arg14[%c0_19, %c0_20] : memref<8x256xf32, #tpu.memory_space<vmem>>, vector<8x256xf32>
    tpu.vector_store %arg14[%c0_19, %c0_20], %28 {strides = array<i32>} : memref<8x256xf32, #tpu.memory_space<vmem>>, vector<8x256xf32>,
    %30 = vector.extract_strided_slice %28 {offsets = [0, 0], sizes = [8, 128], strides = [1, 1]} : vector<8x256xf32> to vector<8x128xf32>
    %31 = arith.truncf %30 : vector<8x128xf32> to vector<8x128xbf16>
    %c0_21 = arith.constant 0 : index
    %c0_22 = arith.constant 0 : index
    %32 = vector.load %arg8[%c0_21, %c0_22] : memref<128x256xbf16, #tpu.memory_space<vmem>>, vector<128x256xbf16>
    %cst_23 = arith.constant dense<0.000000e+00> : vector<8x256xf32>
    %33 = tpu.matmul %31, %32, %cst_23 {dimension_numbers = #tpu.dot_dimension_numbers<[1], [0], [0], [1], [0, 0, 1, 1], [], []>} : vector<8x128xbf16>, vector<128x256xbf16>, vector<8x256xf32> -> vector<8x256xf32>
    %c0_24 = arith.constant 0 : index
    %c0_25 = arith.constant 0 : index
    %34 = vector.load %arg9[%c0_24, %c0_25] : memref<1x256xf32, #tpu.memory_space<vmem>>, vector<1x256xf32>
    %35 = vector.broadcast %34 : vector<1x256xf32> to vector<8x256xf32>
    %36 = arith.addf %33, %35 : vector<8x256xf32>
    %cst_26 = arith.constant 0.000000e+00 : f32
    %37 = vector.broadcast %cst_26 : f32 to vector<8x256xf32>
    %38 = arith.cmpf ogt, %36, %37 : vector<8x256xf32>
    %cst_27 = arith.constant 2.000000e-01 : f32
    %39 = vector.broadcast %cst_27 : f32 to vector<8x256xf32>
    %40 = arith.mulf %39, %36 : vector<8x256xf32>
    %41 = arith.select %38, %36, %40 : vector<8x256xi1>, vector<8x256xf32>
    %42 = arith.truncf %41 : vector<8x256xf32> to vector<8x256xbf16>
    %c0_28 = arith.constant 0 : index
    %c0_29 = arith.constant 0 : index
    %43 = vector.load %arg10[%c0_28, %c0_29] : memref<256x512xbf16, #tpu.memory_space<vmem>>, vector<256x512xbf16>
    %cst_30 = arith.constant dense<0.000000e+00> : vector<8x512xf32>
    %44 = tpu.matmul %42, %43, %cst_30 {dimension_numbers = #tpu.dot_dimension_numbers<[1], [0], [0], [1], [0, 0, 1, 1], [], []>} : vector<8x256xbf16>, vector<256x512xbf16>, vector<8x512xf32> -> vector<8x512xf32>
    %c0_31 = arith.constant 0 : index
    %c0_32 = arith.constant 0 : index
    %45 = vector.load %arg11[%c0_31, %c0_32] : memref<1x512xf32, #tpu.memory_space<vmem>>, vector<1x512xf32>
    %46 = vector.broadcast %45 : vector<1x512xf32> to vector<8x512xf32>
    %47 = arith.addf %44, %46 : vector<8x512xf32>
    %cst_33 = arith.constant 0.000000e+00 : f32
    %48 = vector.broadcast %cst_33 : f32 to vector<8x512xf32>
    %49 = arith.cmpf ogt, %47, %48 : vector<8x512xf32>
    %cst_34 = arith.constant 2.000000e-01 : f32
    %50 = vector.broadcast %cst_34 : f32 to vector<8x512xf32>
    %51 = arith.mulf %50, %47 : vector<8x512xf32>
    %52 = arith.select %49, %47, %51 : vector<8x512xi1>, vector<8x512xf32>
    %53 = arith.truncf %52 : vector<8x512xf32> to vector<8x512xbf16>
    %c0_35 = arith.constant 0 : index
    %c0_36 = arith.constant 0 : index
    %54 = vector.load %arg12[%c0_35, %c0_36] : memref<512x256xbf16, #tpu.memory_space<vmem>>, vector<512x256xbf16>
    %cst_37 = arith.constant dense<0.000000e+00> : vector<8x256xf32>
    %55 = tpu.matmul %53, %54, %cst_37 {dimension_numbers = #tpu.dot_dimension_numbers<[1], [0], [0], [1], [0, 0, 1, 1], [], []>} : vector<8x512xbf16>, vector<512x256xbf16>, vector<8x256xf32> -> vector<8x256xf32>
    %c0_38 = arith.constant 0 : index
    %c0_39 = arith.constant 0 : index
    %56 = vector.load %arg13[%c0_38, %c0_39] : memref<1x256xf32, #tpu.memory_space<vmem>>, vector<1x256xf32>
    %57 = vector.broadcast %56 : vector<1x256xf32> to vector<8x256xf32>
    %58 = arith.addf %55, %57 : vector<8x256xf32>
    %c0_40 = arith.constant 0 : index
    %c0_41 = arith.constant 0 : index
    %59 = vector.load %arg15[%c0_40, %c0_41] : memref<8x256xf32, #tpu.memory_space<vmem>>, vector<8x256xf32>
    tpu.vector_store %arg15[%c0_40, %c0_41], %58 {strides = array<i32>} : memref<8x256xf32, #tpu.memory_space<vmem>>, vector<8x256xf32>,
    return
  }
  func.func @transform_0(%arg0: i32) -> (i32, i32) {
    %c0_i32 = arith.constant 0 : i32
    %c0_i32_0 = arith.constant 0 : i32
    return %arg0, %c0_i32 : i32, i32
  }
  func.func @transform_1(%arg0: i32) -> (i32, i32) {
    %c0_i32 = arith.constant 0 : i32
    %c0_i32_0 = arith.constant 0 : i32
    %c0_i32_1 = arith.constant 0 : i32
    return %c0_i32, %c0_i32_0 : i32, i32
  }
  func.func @transform_2(%arg0: i32) -> (i32, i32) {
    %c0_i32 = arith.constant 0 : i32
    %c0_i32_0 = arith.constant 0 : i32
    %c0_i32_1 = arith.constant 0 : i32
    return %c0_i32, %c0_i32_0 : i32, i32
  }
  func.func @transform_3(%arg0: i32) -> (i32, i32) {
    %c0_i32 = arith.constant 0 : i32
    %c0_i32_0 = arith.constant 0 : i32
    %c0_i32_1 = arith.constant 0 : i32
    return %c0_i32, %c0_i32_0 : i32, i32
  }
  func.func @transform_4(%arg0: i32) -> (i32, i32) {
    %c0_i32 = arith.constant 0 : i32
    %c0_i32_0 = arith.constant 0 : i32
    %c0_i32_1 = arith.constant 0 : i32
    return %c0_i32, %c0_i32_0 : i32, i32
  }
  func.func @transform_5(%arg0: i32) -> (i32, i32) {
    %c0_i32 = arith.constant 0 : i32
    %c0_i32_0 = arith.constant 0 : i32
    %c0_i32_1 = arith.constant 0 : i32
    return %c0_i32, %c0_i32_0 : i32, i32
  }
  func.func @transform_6(%arg0: i32) -> (i32, i32) {
    %c0_i32 = arith.constant 0 : i32
    %c0_i32_0 = arith.constant 0 : i32
    %c0_i32_1 = arith.constant 0 : i32
    return %c0_i32, %c0_i32_0 : i32, i32
  }
  func.func @transform_7(%arg0: i32) -> (i32, i32) {
    %c0_i32 = arith.constant 0 : i32
    %c0_i32_0 = arith.constant 0 : i32
    %c0_i32_1 = arith.constant 0 : i32
    return %c0_i32, %c0_i32_0 : i32, i32
  }
  func.func @transform_8(%arg0: i32) -> (i32, i32) {
    %c0_i32 = arith.constant 0 : i32
    %c0_i32_0 = arith.constant 0 : i32
    %c0_i32_1 = arith.constant 0 : i32
    return %c0_i32, %c0_i32_0 : i32, i32
  }
  func.func @transform_9(%arg0: i32) -> (i32, i32) {
    %c0_i32 = arith.constant 0 : i32
    %c0_i32_0 = arith.constant 0 : i32
    %c0_i32_1 = arith.constant 0 : i32
    return %c0_i32, %c0_i32_0 : i32, i32
  }
  func.func @transform_10(%arg0: i32) -> (i32, i32) {
    %c0_i32 = arith.constant 0 : i32
    %c0_i32_0 = arith.constant 0 : i32
    %c0_i32_1 = arith.constant 0 : i32
    return %c0_i32, %c0_i32_0 : i32, i32
  }
  func.func @transform_11(%arg0: i32) -> (i32, i32) {
    %c0_i32 = arith.constant 0 : i32
    %c0_i32_0 = arith.constant 0 : i32
    %c0_i32_1 = arith.constant 0 : i32
    return %c0_i32, %c0_i32_0 : i32, i32
  }
  func.func @transform_12(%arg0: i32) -> (i32, i32) {
    %c0_i32 = arith.constant 0 : i32
    %c0_i32_0 = arith.constant 0 : i32
    %c0_i32_1 = arith.constant 0 : i32
    return %c0_i32, %c0_i32_0 : i32, i32
  }
  func.func @transform_13(%arg0: i32) -> (i32, i32) {
    %c0_i32 = arith.constant 0 : i32
    %c0_i32_0 = arith.constant 0 : i32
    return %arg0, %c0_i32 : i32, i32
  }
  func.func @transform_14(%arg0: i32) -> (i32, i32) {
    %c0_i32 = arith.constant 0 : i32
    %c0_i32_0 = arith.constant 0 : i32
    return %arg0, %c0_i32 : i32, i32
  }
}

</mosaic_0001>

<llo_original>
// kernel: discriminator_with_autoencoder.1
$region0: #{discriminator_with_autoencoder.1}
  #allocation0 [shape = 'u32[]', space=smem, size = 0x4, offset = 0x4, fixed_abs, tag = 'smem constant byte address 0x4 - core index']
  #allocation1 [shape = 'u32[144,128]{1,0:T(1,128)}', space=vmem, size = 0x12000, scoped, tag = 'internal scratch']
  %s0 = inlined_call_operand.vmem [shape: f32[8,256], index: 0, kind: input, shape index: {}]
  %s1 = inlined_call_operand.vmem [shape: bf16[256,512], index: 1, kind: input, shape index: {}]
  %s2 = inlined_call_operand.vmem [shape: f32[1,512], index: 2, kind: input, shape index: {}]
  %s3 = inlined_call_operand.vmem [shape: bf16[512,256], index: 3, kind: input, shape index: {}]
  %s4 = inlined_call_operand.vmem [shape: f32[1,256], index: 4, kind: input, shape index: {}]
  %s5 = inlined_call_operand.vmem [shape: bf16[256,256], index: 5, kind: input, shape index: {}]
  %s6 = inlined_call_operand.vmem [shape: f32[1,256], index: 6, kind: input, shape index: {}]
  %s7 = inlined_call_operand.vmem [shape: bf16[128,256], index: 7, kind: input, shape index: {}]
  %s8 = inlined_call_operand.vmem [shape: f32[1,256], index: 8, kind: input, shape index: {}]
  %s9 = inlined_call_operand.vmem [shape: bf16[256,512], index: 9, kind: input, shape index: {}]
  %s10 = inlined_call_operand.vmem [shape: f32[1,512], index: 10, kind: input, shape index: {}]
  %s11 = inlined_call_operand.vmem [shape: bf16[512,256], index: 11, kind: input, shape index: {}]
  %s12 = inlined_call_operand.vmem [shape: f32[1,256], index: 12, kind: input, shape index: {}]
  %s13 = inlined_call_operand.vmem [shape: f32[8,256], index: 13, kind: output, shape index: {0}]
  %s14 = inlined_call_operand.vmem [shape: f32[8,256], index: 14, kind: output, shape index: {1}]
  %15 = xla_tuple %s13, %s14
  %s16 = sld [smem:[#allocation0]]
  $region70: #{discriminator_with_autoencoder.1} parent=0
    _
  %s18 = ssub.s32 1, %s16
  %s19 = scalar_select 0, %s18, %s16
  // Predicated region
  $region2: #{discriminator_with_autoencoder.1} parent=0 // pred_check
    _
  $region3: #{discriminator_with_autoencoder.1} parent=0 // pred_check_branch
    %21 = sbr.rel (0) target = $region5
  $region4: #{discriminator_with_autoencoder.1} parent=0 // pred_region
    _
  $region5: #{discriminator_with_autoencoder.1} parent=0 // pred_fallthru
    _
  // Predicated region
  $region6: #{discriminator_with_autoencoder.1} parent=0 // pred_check
    _
  $region7: #{discriminator_with_autoencoder.1} parent=0 // pred_check_branch
    %23 = sbr.rel (0) target = $region9
  $region8: #{discriminator_with_autoencoder.1} parent=0 // pred_region
    _
  $region9: #{discriminator_with_autoencoder.1} parent=0 // pred_fallthru
    _
  // Predicated region
  $region10: #{discriminator_with_autoencoder.1} parent=0 // pred_check
    _
  $region11: #{discriminator_with_autoencoder.1} parent=0 // pred_check_branch
    %25 = sbr.rel (0) target = $region13
  $region12: #{discriminator_with_autoencoder.1} parent=0 // pred_region
    _
  $region13: #{discriminator_with_autoencoder.1} parent=0 // pred_fallthru
    _
  // Predicated region
  $region14: #{discriminator_with_autoencoder.1} parent=0 // pred_check
    _
  $region15: #{discriminator_with_autoencoder.1} parent=0 // pred_check_branch
    %27 = sbr.rel (0) target = $region17
  $region16: #{discriminator_with_autoencoder.1} parent=0 // pred_region
    _
  $region17: #{discriminator_with_autoencoder.1} parent=0 // pred_fallthru
    _
  // Predicated region
  $region18: #{discriminator_with_autoencoder.1} parent=0 // pred_check
    _
  $region19: #{discriminator_with_autoencoder.1} parent=0 // pred_check_branch
    %29 = sbr.rel (0) target = $region21
  $region20: #{discriminator_with_autoencoder.1} parent=0 // pred_region
    _
  $region21: #{discriminator_with_autoencoder.1} parent=0 // pred_fallthru
    _
  // Predicated region
  $region22: #{discriminator_with_autoencoder.1} parent=0 // pred_check
    _
  $region23: #{discriminator_with_autoencoder.1} parent=0 // pred_check_branch
    %31 = sbr.rel (0) target = $region25
  $region24: #{discriminator_with_autoencoder.1} parent=0 // pred_region
    _
  $region25: #{discriminator_with_autoencoder.1} parent=0 // pred_fallthru
    _
  // Predicated region
  $region26: #{discriminator_with_autoencoder.1} parent=0 // pred_check
    _
  $region27: #{discriminator_with_autoencoder.1} parent=0 // pred_check_branch
    %33 = sbr.rel (0) target = $region29
  $region28: #{discriminator_with_autoencoder.1} parent=0 // pred_region
    _
  $region29: #{discriminator_with_autoencoder.1} parent=0 // pred_fallthru
    _
  // Predicated region
  $region30: #{discriminator_with_autoencoder.1} parent=0 // pred_check
    _
  $region31: #{discriminator_with_autoencoder.1} parent=0 // pred_check_branch
    %35 = sbr.rel (0) target = $region33
  $region32: #{discriminator_with_autoencoder.1} parent=0 // pred_region
    _
  $region33: #{discriminator_with_autoencoder.1} parent=0 // pred_fallthru
    _
  // Predicated region
  $region34: #{discriminator_with_autoencoder.1} parent=0 // pred_check
    _
  $region35: #{discriminator_with_autoencoder.1} parent=0 // pred_check_branch
    %37 = sbr.rel (0) target = $region37
  $region36: #{discriminator_with_autoencoder.1} parent=0 // pred_region
    _
  $region37: #{discriminator_with_autoencoder.1} parent=0 // pred_fallthru
    _
  // Predicated region
  $region38: #{discriminator_with_autoencoder.1} parent=0 // pred_check
    _
  $region39: #{discriminator_with_autoencoder.1} parent=0 // pred_check_branch
    %39 = sbr.rel (0) target = $region41
  $region40: #{discriminator_with_autoencoder.1} parent=0 // pred_region
    _
  $region41: #{discriminator_with_autoencoder.1} parent=0 // pred_fallthru
    _
  // Predicated region
  $region42: #{discriminator_with_autoencoder.1} parent=0 // pred_check
    _
  $region43: #{discriminator_with_autoencoder.1} parent=0 // pred_check_branch
    %41 = sbr.rel (0) target = $region45
  $region44: #{discriminator_with_autoencoder.1} parent=0 // pred_region
    _
  $region45: #{discriminator_with_autoencoder.1} parent=0 // pred_fallthru
    _
  // Predicated region
  $region46: #{discriminator_with_autoencoder.1} parent=0 // pred_check
    _
  $region47: #{discriminator_with_autoencoder.1} parent=0 // pred_check_branch
    %43 = sbr.rel (0) target = $region49
  $region48: #{discriminator_with_autoencoder.1} parent=0 // pred_region
    _
  $region49: #{discriminator_with_autoencoder.1} parent=0 // pred_fallthru
    _
  // Predicated region
  $region50: #{discriminator_with_autoencoder.1} parent=0 // pred_check
    _
  $region51: #{discriminator_with_autoencoder.1} parent=0 // pred_check_branch
    %45 = sbr.rel (0) target = $region53
  $region52: #{discriminator_with_autoencoder.1} parent=0 // pred_region
    _
  $region53: #{discriminator_with_autoencoder.1} parent=0 // pred_fallthru
    _
  %v47 = vld [vmem:[%s0] sm:$0xff]
  %v48 = vld [vmem:[%s0 + $0x8] sm:$0xff]
  %v49 = vpack.c.bf16 %v47, %v47
  %v50 = vpack.c.bf16 %v48, %v48
  %v51 = vld [vmem:[%s1] sm:$0xff]
  %v52 = vld [vmem:[%s1 + $0x8] sm:$0xff]
  %v53 = vld [vmem:[%s1 + $0x10] sm:$0xff]
  %v54 = vld [vmem:[%s1 + $0x18] sm:$0xff]
  %v55 = vld [vmem:[%s1 + $0x20] sm:$0xff]
  %v56 = vld [vmem:[%s1 + $0x28] sm:$0xff]
  %v57 = vld [vmem:[%s1 + $0x30] sm:$0xff]
  %v58 = vld [vmem:[%s1 + $0x38] sm:$0xff]
  %v59 = vld [vmem:[%s1 + $0x40] sm:$0xff]
  %v60 = vld [vmem:[%s1 + $0x48] sm:$0xff]
  %v61 = vld [vmem:[%s1 + $0x50] sm:$0xff]
  %v62 = vld [vmem:[%s1 + $0x58] sm:$0xff]
  %v63 = vld [vmem:[%s1 + $0x60] sm:$0xff]
  %v64 = vld [vmem:[%s1 + $0x68] sm:$0xff]
  %v65 = vld [vmem:[%s1 + $0x70] sm:$0xff]
  %v66 = vld [vmem:[%s1 + $0x78] sm:$0xff]
  %v67 = vld [vmem:[%s1 + $0x80] sm:$0xff]
  %v68 = vld [vmem:[%s1 + $0x88] sm:$0xff]
  %v69 = vld [vmem:[%s1 + $0x90] sm:$0xff]
  %v70 = vld [vmem:[%s1 + $0x98] sm:$0xff]
  %v71 = vld [vmem:[%s1 + $0xa0] sm:$0xff]
  %v72 = vld [vmem:[%s1 + $0xa8] sm:$0xff]
  %v73 = vld [vmem:[%s1 + $0xb0] sm:$0xff]
  %v74 = vld [vmem:[%s1 + $0xb8] sm:$0xff]
  %v75 = vld [vmem:[%s1 + $0xc0] sm:$0xff]
  %v76 = vld [vmem:[%s1 + $0xc8] sm:$0xff]
  %v77 = vld [vmem:[%s1 + $0xd0] sm:$0xff]
  %v78 = vld [vmem:[%s1 + $0xd8] sm:$0xff]
  %v79 = vld [vmem:[%s1 + $0xe0] sm:$0xff]
  %v80 = vld [vmem:[%s1 + $0xe8] sm:$0xff]
  %v81 = vld [vmem:[%s1 + $0xf0] sm:$0xff]
  %v82 = vld [vmem:[%s1 + $0xf8] sm:$0xff]
  %v83 = vld [vmem:[%s1 + $0x100] sm:$0xff]
  %v84 = vld [vmem:[%s1 + $0x108] sm:$0xff]
  %v85 = vld [vmem:[%s1 + $0x110] sm:$0xff]
  %v86 = vld [vmem:[%s1 + $0x118] sm:$0xff]
  %v87 = vld [vmem:[%s1 + $0x120] sm:$0xff]
  %v88 = vld [vmem:[%s1 + $0x128] sm:$0xff]
  %v89 = vld [vmem:[%s1 + $0x130] sm:$0xff]
  %v90 = vld [vmem:[%s1 + $0x138] sm:$0xff]
  %v91 = vld [vmem:[%s1 + $0x140] sm:$0xff]
  %v92 = vld [vmem:[%s1 + $0x148] sm:$0xff]
  %v93 = vld [vmem:[%s1 + $0x150] sm:$0xff]
  %v94 = vld [vmem:[%s1 + $0x158] sm:$0xff]
  %v95 = vld [vmem:[%s1 + $0x160] sm:$0xff]
  %v96 = vld [vmem:[%s1 + $0x168] sm:$0xff]
  %v97 = vld [vmem:[%s1 + $0x170] sm:$0xff]
  %v98 = vld [vmem:[%s1 + $0x178] sm:$0xff]
  %v99 = vld [vmem:[%s1 + $0x180] sm:$0xff]
  %v100 = vld [vmem:[%s1 + $0x188] sm:$0xff]
  %v101 = vld [vmem:[%s1 + $0x190] sm:$0xff]
  %v102 = vld [vmem:[%s1 + $0x198] sm:$0xff]
  %v103 = vld [vmem:[%s1 + $0x1a0] sm:$0xff]
  %v104 = vld [vmem:[%s1 + $0x1a8] sm:$0xff]
  %v105 = vld [vmem:[%s1 + $0x1b0] sm:$0xff]
  %v106 = vld [vmem:[%s1 + $0x1b8] sm:$0xff]
  %v107 = vld [vmem:[%s1 + $0x1c0] sm:$0xff]
  %v108 = vld [vmem:[%s1 + $0x1c8] sm:$0xff]
  %v109 = vld [vmem:[%s1 + $0x1d0] sm:$0xff]
  %v110 = vld [vmem:[%s1 + $0x1d8] sm:$0xff]
  %v111 = vld [vmem:[%s1 + $0x1e0] sm:$0xff]
  %v112 = vld [vmem:[%s1 + $0x1e8] sm:$0xff]
  %v113 = vld [vmem:[%s1 + $0x1f0] sm:$0xff]
  %v114 = vld [vmem:[%s1 + $0x1f8] sm:$0xff]
  %v115 = vld [vmem:[%s2] sm:$0xf]
  %v117 = vlaneseq
  %v118 = vshrl.u32 %v117, 7
  %v119 = vsub.s32 0, %v118
  %v120 = vrot.slane %v115, %v119
  %v121 = vlaneseq
  %v122 = vshrl.u32 %v121, 7
  %v123 = vsub.s32 1, %v122
  %v124 = vrot.slane %v115, %v123
  %v125 = vlaneseq
  %v126 = vshrl.u32 %v125, 7
  %v127 = vsub.s32 2, %v126
  %v128 = vrot.slane %v115, %v127
  %v129 = vlaneseq
  %v130 = vshrl.u32 %v129, 7
  %v131 = vsub.s32 3, %v130
  %v132 = vrot.slane %v115, %v131
  %v201 = vunpack.c.l.b16 %v51
  %v202 = vunpack.c.h.b16 %v51
  %v203 = vunpack.c.l.b16 %v52
  %v204 = vunpack.c.h.b16 %v52
  %v205 = vunpack.c.l.b16 %v53
  %v206 = vunpack.c.h.b16 %v53
  %v207 = vunpack.c.l.b16 %v54
  %v208 = vunpack.c.h.b16 %v54
  %v209 = vunpack.c.l.b16 %v55
  %v210 = vunpack.c.h.b16 %v55
  %v211 = vunpack.c.l.b16 %v56
  %v212 = vunpack.c.h.b16 %v56
  %v213 = vunpack.c.l.b16 %v57
  %v214 = vunpack.c.h.b16 %v57
  %v215 = vunpack.c.l.b16 %v58
  %v216 = vunpack.c.h.b16 %v58
  %v217 = vunpack.c.l.b16 %v59
  %v218 = vunpack.c.h.b16 %v59
  %v219 = vunpack.c.l.b16 %v60
  %v220 = vunpack.c.h.b16 %v60
  %v221 = vunpack.c.l.b16 %v61
  %v222 = vunpack.c.h.b16 %v61
  %v223 = vunpack.c.l.b16 %v62
  %v224 = vunpack.c.h.b16 %v62
  %v225 = vunpack.c.l.b16 %v63
  %v226 = vunpack.c.h.b16 %v63
  %v227 = vunpack.c.l.b16 %v64
  %v228 = vunpack.c.h.b16 %v64
  %v229 = vunpack.c.l.b16 %v65
  %v230 = vunpack.c.h.b16 %v65
  %v231 = vunpack.c.l.b16 %v66
  %v232 = vunpack.c.h.b16 %v66
  %v233 = vunpack.c.l.b16 %v67
  %v234 = vunpack.c.h.b16 %v67
  %v235 = vunpack.c.l.b16 %v68
  %v236 = vunpack.c.h.b16 %v68
  %v237 = vunpack.c.l.b16 %v69
  %v238 = vunpack.c.h.b16 %v69
  %v239 = vunpack.c.l.b16 %v70
  %v240 = vunpack.c.h.b16 %v70
  %v241 = vunpack.c.l.b16 %v71
  %v242 = vunpack.c.h.b16 %v71
  %v243 = vunpack.c.l.b16 %v72
  %v244 = vunpack.c.h.b16 %v72
  %v245 = vunpack.c.l.b16 %v73
  %v246 = vunpack.c.h.b16 %v73
  %v247 = vunpack.c.l.b16 %v74
  %v248 = vunpack.c.h.b16 %v74
  %v249 = vunpack.c.l.b16 %v75
  %v250 = vunpack.c.h.b16 %v75
  %v251 = vunpack.c.l.b16 %v76
  %v252 = vunpack.c.h.b16 %v76
  %v253 = vunpack.c.l.b16 %v77
  %v254 = vunpack.c.h.b16 %v77
  %v255 = vunpack.c.l.b16 %v78
  %v256 = vunpack.c.h.b16 %v78
  %v257 = vunpack.c.l.b16 %v79
  %v258 = vunpack.c.h.b16 %v79
  %v259 = vunpack.c.l.b16 %v80
  %v260 = vunpack.c.h.b16 %v80
  %v261 = vunpack.c.l.b16 %v81
  %v262 = vunpack.c.h.b16 %v81
  %v263 = vunpack.c.l.b16 %v82
  %v264 = vunpack.c.h.b16 %v82
  %v265 = vunpack.c.l.b16 %v83
  %v266 = vunpack.c.h.b16 %v83
  %v267 = vunpack.c.l.b16 %v84
  %v268 = vunpack.c.h.b16 %v84
  %v269 = vunpack.c.l.b16 %v85
  %v270 = vunpack.c.h.b16 %v85
  %v271 = vunpack.c.l.b16 %v86
  %v272 = vunpack.c.h.b16 %v86
  %v273 = vunpack.c.l.b16 %v87
  %v274 = vunpack.c.h.b16 %v87
  %v275 = vunpack.c.l.b16 %v88
  %v276 = vunpack.c.h.b16 %v88
  %v277 = vunpack.c.l.b16 %v89
  %v278 = vunpack.c.h.b16 %v89
  %v279 = vunpack.c.l.b16 %v90
  %v280 = vunpack.c.h.b16 %v90
  %v281 = vunpack.c.l.b16 %v91
  %v282 = vunpack.c.h.b16 %v91
  %v283 = vunpack.c.l.b16 %v92
  %v284 = vunpack.c.h.b16 %v92
  %v285 = vunpack.c.l.b16 %v93
  %v286 = vunpack.c.h.b16 %v93
  %v287 = vunpack.c.l.b16 %v94
  %v288 = vunpack.c.h.b16 %v94
  %v289 = vunpack.c.l.b16 %v95
  %v290 = vunpack.c.h.b16 %v95
  %v291 = vunpack.c.l.b16 %v96
  %v292 = vunpack.c.h.b16 %v96
  %v293 = vunpack.c.l.b16 %v97
  %v294 = vunpack.c.h.b16 %v97
  %v295 = vunpack.c.l.b16 %v98
  %v296 = vunpack.c.h.b16 %v98
  %v297 = vunpack.c.l.b16 %v99
  %v298 = vunpack.c.h.b16 %v99
  %v299 = vunpack.c.l.b16 %v100
  %v300 = vunpack.c.h.b16 %v100
  %v301 = vunpack.c.l.b16 %v101
  %v302 = vunpack.c.h.b16 %v101
  %v303 = vunpack.c.l.b16 %v102
  %v304 = vunpack.c.h.b16 %v102
  %v305 = vunpack.c.l.b16 %v103
  %v306 = vunpack.c.h.b16 %v103
  %v307 = vunpack.c.l.b16 %v104
  %v308 = vunpack.c.h.b16 %v104
  %v309 = vunpack.c.l.b16 %v105
  %v310 = vunpack.c.h.b16 %v105
  %v311 = vunpack.c.l.b16 %v106
  %v312 = vunpack.c.h.b16 %v106
  %v313 = vunpack.c.l.b16 %v107
  %v314 = vunpack.c.h.b16 %v107
  %v315 = vunpack.c.l.b16 %v108
  %v316 = vunpack.c.h.b16 %v108
  %v317 = vunpack.c.l.b16 %v109
  %v318 = vunpack.c.h.b16 %v109
  %v319 = vunpack.c.l.b16 %v110
  %v320 = vunpack.c.h.b16 %v110
  %v321 = vunpack.c.l.b16 %v111
  %v322 = vunpack.c.h.b16 %v111
  %v323 = vunpack.c.l.b16 %v112
  %v324 = vunpack.c.h.b16 %v112
  %v325 = vunpack.c.l.b16 %v113
  %v326 = vunpack.c.h.b16 %v113
  %v327 = vunpack.c.l.b16 %v114
  %v328 = vunpack.c.h.b16 %v114
  %v329 = vpack.c.b16 %v205, %v201
  %v330 = vpack.c.b16 %v206, %v202
  %v331 = vpack.c.b16 %v207, %v203
  %v332 = vpack.c.b16 %v208, %v204
  %v333 = vpack.c.b16 %v213, %v209
  %v334 = vpack.c.b16 %v214, %v210
  %v335 = vpack.c.b16 %v215, %v211
  %v336 = vpack.c.b16 %v216, %v212
  %v337 = vpack.c.b16 %v221, %v217
  %v338 = vpack.c.b16 %v222, %v218
  %v339 = vpack.c.b16 %v223, %v219
  %v340 = vpack.c.b16 %v224, %v220
  %v341 = vpack.c.b16 %v229, %v225
  %v342 = vpack.c.b16 %v230, %v226
  %v343 = vpack.c.b16 %v231, %v227
  %v344 = vpack.c.b16 %v232, %v228
  %v345 = vpack.c.b16 %v237, %v233
  %v346 = vpack.c.b16 %v238, %v234
  %v347 = vpack.c.b16 %v239, %v235
  %v348 = vpack.c.b16 %v240, %v236
  %v349 = vpack.c.b16 %v245, %v241
  %v350 = vpack.c.b16 %v246, %v242
  %v351 = vpack.c.b16 %v247, %v243
  %v352 = vpack.c.b16 %v248, %v244
  %v353 = vpack.c.b16 %v253, %v249
  %v354 = vpack.c.b16 %v254, %v250
  %v355 = vpack.c.b16 %v255, %v251
  %v356 = vpack.c.b16 %v256, %v252
  %v357 = vpack.c.b16 %v261, %v257
  %v358 = vpack.c.b16 %v262, %v258
  %v359 = vpack.c.b16 %v263, %v259
  %v360 = vpack.c.b16 %v264, %v260
  %v361 = vpack.c.b16 %v269, %v265
  %v362 = vpack.c.b16 %v270, %v266
  %v363 = vpack.c.b16 %v271, %v267
  %v364 = vpack.c.b16 %v272, %v268
  %v365 = vpack.c.b16 %v277, %v273
  %v366 = vpack.c.b16 %v278, %v274
  %v367 = vpack.c.b16 %v279, %v275
  %v368 = vpack.c.b16 %v280, %v276
  %v369 = vpack.c.b16 %v285, %v281
  %v370 = vpack.c.b16 %v286, %v282
  %v371 = vpack.c.b16 %v287, %v283
  %v372 = vpack.c.b16 %v288, %v284
  %v373 = vpack.c.b16 %v293, %v289
  %v374 = vpack.c.b16 %v294, %v290
  %v375 = vpack.c.b16 %v295, %v291
  %v376 = vpack.c.b16 %v296, %v292
  %v377 = vpack.c.b16 %v301, %v297
  %v378 = vpack.c.b16 %v302, %v298
  %v379 = vpack.c.b16 %v303, %v299
  %v380 = vpack.c.b16 %v304, %v300
  %v381 = vpack.c.b16 %v309, %v305
  %v382 = vpack.c.b16 %v310, %v306
  %v383 = vpack.c.b16 %v311, %v307
  %v384 = vpack.c.b16 %v312, %v308
  %v385 = vpack.c.b16 %v317, %v313
  %v386 = vpack.c.b16 %v318, %v314
  %v387 = vpack.c.b16 %v319, %v315
  %v388 = vpack.c.b16 %v320, %v316
  %v389 = vpack.c.b16 %v325, %v321
  %v390 = vpack.c.b16 %v326, %v322
  %v391 = vpack.c.b16 %v327, %v323
  %v392 = vpack.c.b16 %v328, %v324
  %457 = vmatprep.subr.bf16.mxu0 %v330
  %458 = vmatpush1.bf16.msra.mxu0 %v329
  %459 = vmatprep.subr.bf16.mxu0 %v334
  %460 = vmatpush1.bf16.msra.mxu0 %v333
  %461 = vmatprep.subr.bf16.mxu0 %v338
  %462 = vmatpush1.bf16.msra.mxu0 %v337
  %463 = vmatprep.subr.bf16.mxu0 %v342
  %464 = vmatpush1.bf16.msra.mxu0 %v341
  %465 = vmatprep.subr.bf16.mxu0 %v346
  %466 = vmatpush1.bf16.msra.mxu0 %v345
  %467 = vmatprep.subr.bf16.mxu0 %v350
  %468 = vmatpush1.bf16.msra.mxu0 %v349
  %469 = vmatprep.subr.bf16.mxu0 %v354
  %470 = vmatpush1.bf16.msra.mxu0 %v353
  %471 = vmatprep.subr.bf16.mxu0 %v358
  %472 = vmatpush1.bf16.msra.mxu0 %v357
  %473 = vmatprep.subr.bf16.mxu0 %v362
  %474 = vmatpush1.bf16.msra.mxu0 %v361
  %475 = vmatprep.subr.bf16.mxu0 %v366
  %476 = vmatpush1.bf16.msra.mxu0 %v365
  %477 = vmatprep.subr.bf16.mxu0 %v370
  %478 = vmatpush1.bf16.msra.mxu0 %v369
  %479 = vmatprep.subr.bf16.mxu0 %v374
  %480 = vmatpush1.bf16.msra.mxu0 %v373
  %481 = vmatprep.subr.bf16.mxu0 %v378
  %482 = vmatpush1.bf16.msra.mxu0 %v377
  %483 = vmatprep.subr.bf16.mxu0 %v382
  %484 = vmatpush1.bf16.msra.mxu0 %v381
  %485 = vmatprep.subr.bf16.mxu0 %v386
  %486 = vmatpush1.bf16.msra.mxu0 %v385
  %487 = vmatprep.subr.bf16.mxu0 %v390
  %488 = vmatpush1.bf16.msra.mxu0 %v389
  %489 = vmatprep.mubr.bf16.mxu0 %v50
  %490 = vmatmul.mubr.bf16.gmra.mrb[0].mxu0 %v49
  %v491 = vpop.f32.mrb[0].mxu0
  %v492 = vadd.f32 %v120, %v491
  %v493 = vpop.f32.mrb[0].mxu0
  %v494 = vadd.f32 %v124, %v493
  %v495 = vpop.f32.mrb[0].mxu0
  %v496 = vpop.f32.mrb[0].mxu0
  %497 = vdwg.mxu0
  %498 = vmatprep.subr.bf16.mxu0 %v332
  %499 = vmatpush1.bf16.msra.mxu0 %v331
  %500 = vmatprep.subr.bf16.mxu0 %v336
  %501 = vmatpush1.bf16.msra.mxu0 %v335
  %502 = vmatprep.subr.bf16.mxu0 %v340
  %503 = vmatpush1.bf16.msra.mxu0 %v339
  %504 = vmatprep.subr.bf16.mxu0 %v344
  %505 = vmatpush1.bf16.msra.mxu0 %v343
  %506 = vmatprep.subr.bf16.mxu0 %v348
  %507 = vmatpush1.bf16.msra.mxu0 %v347
  %508 = vmatprep.subr.bf16.mxu0 %v352
  %509 = vmatpush1.bf16.msra.mxu0 %v351
  %510 = vmatprep.subr.bf16.mxu0 %v356
  %511 = vmatpush1.bf16.msra.mxu0 %v355
  %512 = vmatprep.subr.bf16.mxu0 %v360
  %513 = vmatpush1.bf16.msra.mxu0 %v359
  %514 = vmatprep.subr.bf16.mxu0 %v364
  %515 = vmatpush1.bf16.msra.mxu0 %v363
  %516 = vmatprep.subr.bf16.mxu0 %v368
  %517 = vmatpush1.bf16.msra.mxu0 %v367
  %518 = vmatprep.subr.bf16.mxu0 %v372
  %519 = vmatpush1.bf16.msra.mxu0 %v371
  %520 = vmatprep.subr.bf16.mxu0 %v376
  %521 = vmatpush1.bf16.msra.mxu0 %v375
  %522 = vmatprep.subr.bf16.mxu0 %v380
  %523 = vmatpush1.bf16.msra.mxu0 %v379
  %524 = vmatprep.subr.bf16.mxu0 %v384
  %525 = vmatpush1.bf16.msra.mxu0 %v383
  %526 = vmatprep.subr.bf16.mxu0 %v388
  %527 = vmatpush1.bf16.msra.mxu0 %v387
  %528 = vmatprep.subr.bf16.mxu0 %v392
  %529 = vmatpush1.bf16.msra.mxu0 %v391
  %530 = vmatprep.mubr.bf16.mxu0 %v50
  %531 = vmatmul.mubr.bf16.gmra.mrb[0].mxu0 %v49
  %v532 = vpop.f32.mrb[0].mxu0
  %v533 = vadd.f32 %v128, %v532
  %v534 = vpop.f32.mrb[0].mxu0
  %v535 = vadd.f32 %v132, %v534
  %v536 = vpop.f32.mrb[0].mxu0
  %v537 = vpop.f32.mrb[0].mxu0
  %538 = vdwg.mxu0
  %vm539 = vcmp.gt.f32.partialorder %v492, 0.0
  %vm540 = vcmp.gt.f32.partialorder %v494, 0.0
  %vm541 = vcmp.gt.f32.partialorder %v533, 0.0
  %vm542 = vcmp.gt.f32.partialorder %v535, 0.0
  %v543 = vmul.f32 %v492, 0.2
  %v544 = vmul.f32 %v494, 0.2
  %v545 = vmul.f32 %v533, 0.2
  %v546 = vmul.f32 %v535, 0.2
  %v547 = vsel %vm539, %v492, %v543
  %v548 = vsel %vm540, %v494, %v544
  %v549 = vsel %vm541, %v533, %v545
  %v550 = vsel %vm542, %v535, %v546
  %v551 = vpack.c.bf16 %v547, %v547
  %v552 = vpack.c.bf16 %v548, %v548
  %v553 = vpack.c.bf16 %v549, %v549
  %v554 = vpack.c.bf16 %v550, %v550
  %v555 = vld [vmem:[%s3] sm:$0xff]
  %v556 = vld [vmem:[%s3 + $0x8] sm:$0xff]
  %v557 = vld [vmem:[%s3 + $0x10] sm:$0xff]
  %v558 = vld [vmem:[%s3 + $0x18] sm:$0xff]
  %v559 = vld [vmem:[%s3 + $0x20] sm:$0xff]
  %v560 = vld [vmem:[%s3 + $0x28] sm:$0xff]
  %v561 = vld [vmem:[%s3 + $0x30] sm:$0xff]
  %v562 = vld [vmem:[%s3 + $0x38] sm:$0xff]
  %v563 = vld [vmem:[%s3 + $0x40] sm:$0xff]
  %v564 = vld [vmem:[%s3 + $0x48] sm:$0xff]
  %v565 = vld [vmem:[%s3 + $0x50] sm:$0xff]
  %v566 = vld [vmem:[%s3 + $0x58] sm:$0xff]
  %v567 = vld [vmem:[%s3 + $0x60] sm:$0xff]
  %v568 = vld [vmem:[%s3 + $0x68] sm:$0xff]
  %v569 = vld [vmem:[%s3 + $0x70] sm:$0xff]
  %v570 = vld [vmem:[%s3 + $0x78] sm:$0xff]
  %v571 = vld [vmem:[%s3 + $0x80] sm:$0xff]
  %v572 = vld [vmem:[%s3 + $0x88] sm:$0xff]
  %v573 = vld [vmem:[%s3 + $0x90] sm:$0xff]
  %v574 = vld [vmem:[%s3 + $0x98] sm:$0xff]
  %v575 = vld [vmem:[%s3 + $0xa0] sm:$0xff]
  %v576 = vld [vmem:[%s3 + $0xa8] sm:$0xff]
  %v577 = vld [vmem:[%s3 + $0xb0] sm:$0xff]
  %v578 = vld [vmem:[%s3 + $0xb8] sm:$0xff]
  %v579 = vld [vmem:[%s3 + $0xc0] sm:$0xff]
  %v580 = vld [vmem:[%s3 + $0xc8] sm:$0xff]
  %v581 = vld [vmem:[%s3 + $0xd0] sm:$0xff]
  %v582 = vld [vmem:[%s3 + $0xd8] sm:$0xff]
  %v583 = vld [vmem:[%s3 + $0xe0] sm:$0xff]
  %v584 = vld [vmem:[%s3 + $0xe8] sm:$0xff]
  %v585 = vld [vmem:[%s3 + $0xf0] sm:$0xff]
  %v586 = vld [vmem:[%s3 + $0xf8] sm:$0xff]
  %v587 = vld [vmem:[%s3 + $0x100] sm:$0xff]
  %v588 = vld [vmem:[%s3 + $0x108] sm:$0xff]
  %v589 = vld [vmem:[%s3 + $0x110] sm:$0xff]
  %v590 = vld [vmem:[%s3 + $0x118] sm:$0xff]
  %v591 = vld [vmem:[%s3 + $0x120] sm:$0xff]
  %v592 = vld [vmem:[%s3 + $0x128] sm:$0xff]
  %v593 = vld [vmem:[%s3 + $0x130] sm:$0xff]
  %v594 = vld [vmem:[%s3 + $0x138] sm:$0xff]
  %v595 = vld [vmem:[%s3 + $0x140] sm:$0xff]
  %v596 = vld [vmem:[%s3 + $0x148] sm:$0xff]
  %v597 = vld [vmem:[%s3 + $0x150] sm:$0xff]
  %v598 = vld [vmem:[%s3 + $0x158] sm:$0xff]
  %v599 = vld [vmem:[%s3 + $0x160] sm:$0xff]
  %v600 = vld [vmem:[%s3 + $0x168] sm:$0xff]
  %v601 = vld [vmem:[%s3 + $0x170] sm:$0xff]
  %v602 = vld [vmem:[%s3 + $0x178] sm:$0xff]
  %v603 = vld [vmem:[%s3 + $0x180] sm:$0xff]
  %v604 = vld [vmem:[%s3 + $0x188] sm:$0xff]
  %v605 = vld [vmem:[%s3 + $0x190] sm:$0xff]
  %v606 = vld [vmem:[%s3 + $0x198] sm:$0xff]
  %v607 = vld [vmem:[%s3 + $0x1a0] sm:$0xff]
  %v608 = vld [vmem:[%s3 + $0x1a8] sm:$0xff]
  %v609 = vld [vmem:[%s3 + $0x1b0] sm:$0xff]
  %v610 = vld [vmem:[%s3 + $0x1b8] sm:$0xff]
  %v611 = vld [vmem:[%s3 + $0x1c0] sm:$0xff]
  %v612 = vld [vmem:[%s3 + $0x1c8] sm:$0xff]
  %v613 = vld [vmem:[%s3 + $0x1d0] sm:$0xff]
  %v614 = vld [vmem:[%s3 + $0x1d8] sm:$0xff]
  %v615 = vld [vmem:[%s3 + $0x1e0] sm:$0xff]
  %v616 = vld [vmem:[%s3 + $0x1e8] sm:$0xff]
  %v617 = vld [vmem:[%s3 + $0x1f0] sm:$0xff]
  %v618 = vld [vmem:[%s3 + $0x1f8] sm:$0xff]
  %v619 = vld [vmem:[%s4] sm:$0x3]
  %v621 = vlaneseq
  %v622 = vshrl.u32 %v621, 7
  %v623 = vsub.s32 0, %v622
  %v624 = vrot.slane %v619, %v623
  %v625 = vlaneseq
  %v626 = vshrl.u32 %v625, 7
  %v627 = vsub.s32 1, %v626
  %v628 = vrot.slane %v619, %v627
  %v695 = vunpack.c.l.b16 %v555
  %v696 = vunpack.c.h.b16 %v555
  %v697 = vunpack.c.l.b16 %v556
  %v698 = vunpack.c.h.b16 %v556
  %v699 = vunpack.c.l.b16 %v557
  %v700 = vunpack.c.h.b16 %v557
  %v701 = vunpack.c.l.b16 %v558
  %v702 = vunpack.c.h.b16 %v558
  %v703 = vunpack.c.l.b16 %v559
  %v704 = vunpack.c.h.b16 %v559
  %v705 = vunpack.c.l.b16 %v560
  %v706 = vunpack.c.h.b16 %v560
  %v707 = vunpack.c.l.b16 %v561
  %v708 = vunpack.c.h.b16 %v561
  %v709 = vunpack.c.l.b16 %v562
  %v710 = vunpack.c.h.b16 %v562
  %v711 = vunpack.c.l.b16 %v563
  %v712 = vunpack.c.h.b16 %v563
  %v713 = vunpack.c.l.b16 %v564
  %v714 = vunpack.c.h.b16 %v564
  %v715 = vunpack.c.l.b16 %v565
  %v716 = vunpack.c.h.b16 %v565
  %v717 = vunpack.c.l.b16 %v566
  %v718 = vunpack.c.h.b16 %v566
  %v719 = vunpack.c.l.b16 %v567
  %v720 = vunpack.c.h.b16 %v567
  %v721 = vunpack.c.l.b16 %v568
  %v722 = vunpack.c.h.b16 %v568
  %v723 = vunpack.c.l.b16 %v569
  %v724 = vunpack.c.h.b16 %v569
  %v725 = vunpack.c.l.b16 %v570
  %v726 = vunpack.c.h.b16 %v570
  %v727 = vunpack.c.l.b16 %v571
  %v728 = vunpack.c.h.b16 %v571
  %v729 = vunpack.c.l.b16 %v572
  %v730 = vunpack.c.h.b16 %v572
  %v731 = vunpack.c.l.b16 %v573
  %v732 = vunpack.c.h.b16 %v573
  %v733 = vunpack.c.l.b16 %v574
  %v734 = vunpack.c.h.b16 %v574
  %v735 = vunpack.c.l.b16 %v575
  %v736 = vunpack.c.h.b16 %v575
  %v737 = vunpack.c.l.b16 %v576
  %v738 = vunpack.c.h.b16 %v576
  %v739 = vunpack.c.l.b16 %v577
  %v740 = vunpack.c.h.b16 %v577
  %v741 = vunpack.c.l.b16 %v578
  %v742 = vunpack.c.h.b16 %v578
  %v743 = vunpack.c.l.b16 %v579
  %v744 = vunpack.c.h.b16 %v579
  %v745 = vunpack.c.l.b16 %v580
  %v746 = vunpack.c.h.b16 %v580
  %v747 = vunpack.c.l.b16 %v581
  %v748 = vunpack.c.h.b16 %v581
  %v749 = vunpack.c.l.b16 %v582
  %v750 = vunpack.c.h.b16 %v582
  %v751 = vunpack.c.l.b16 %v583
  %v752 = vunpack.c.h.b16 %v583
  %v753 = vunpack.c.l.b16 %v584
  %v754 = vunpack.c.h.b16 %v584
  %v755 = vunpack.c.l.b16 %v585
  %v756 = vunpack.c.h.b16 %v585
  %v757 = vunpack.c.l.b16 %v586
  %v758 = vunpack.c.h.b16 %v586
  %v759 = vunpack.c.l.b16 %v587
  %v760 = vunpack.c.h.b16 %v587
  %v761 = vunpack.c.l.b16 %v588
  %v762 = vunpack.c.h.b16 %v588
  %v763 = vunpack.c.l.b16 %v589
  %v764 = vunpack.c.h.b16 %v589
  %v765 = vunpack.c.l.b16 %v590
  %v766 = vunpack.c.h.b16 %v590
  %v767 = vunpack.c.l.b16 %v591
  %v768 = vunpack.c.h.b16 %v591
  %v769 = vunpack.c.l.b16 %v592
  %v770 = vunpack.c.h.b16 %v592
  %v771 = vunpack.c.l.b16 %v593
  %v772 = vunpack.c.h.b16 %v593
  %v773 = vunpack.c.l.b16 %v594
  %v774 = vunpack.c.h.b16 %v594
  %v775 = vunpack.c.l.b16 %v595
  %v776 = vunpack.c.h.b16 %v595
  %v777 = vunpack.c.l.b16 %v596
  %v778 = vunpack.c.h.b16 %v596
  %v779 = vunpack.c.l.b16 %v597
  %v780 = vunpack.c.h.b16 %v597
  %v781 = vunpack.c.l.b16 %v598
  %v782 = vunpack.c.h.b16 %v598
  %v783 = vunpack.c.l.b16 %v599
  %v784 = vunpack.c.h.b16 %v599
  %v785 = vunpack.c.l.b16 %v600
  %v786 = vunpack.c.h.b16 %v600
  %v787 = vunpack.c.l.b16 %v601
  %v788 = vunpack.c.h.b16 %v601
  %v789 = vunpack.c.l.b16 %v602
  %v790 = vunpack.c.h.b16 %v602
  %v791 = vunpack.c.l.b16 %v603
  %v792 = vunpack.c.h.b16 %v603
  %v793 = vunpack.c.l.b16 %v604
  %v794 = vunpack.c.h.b16 %v604
  %v795 = vunpack.c.l.b16 %v605
  %v796 = vunpack.c.h.b16 %v605
  %v797 = vunpack.c.l.b16 %v606
  %v798 = vunpack.c.h.b16 %v606
  %v799 = vunpack.c.l.b16 %v607
  %v800 = vunpack.c.h.b16 %v607
  %v801 = vunpack.c.l.b16 %v608
  %v802 = vunpack.c.h.b16 %v608
  %v803 = vunpack.c.l.b16 %v609
  %v804 = vunpack.c.h.b16 %v609
  %v805 = vunpack.c.l.b16 %v610
  %v806 = vunpack.c.h.b16 %v610
  %v807 = vunpack.c.l.b16 %v611
  %v808 = vunpack.c.h.b16 %v611
  %v809 = vunpack.c.l.b16 %v612
  %v810 = vunpack.c.h.b16 %v612
  %v811 = vunpack.c.l.b16 %v613
  %v812 = vunpack.c.h.b16 %v613
  %v813 = vunpack.c.l.b16 %v614
  %v814 = vunpack.c.h.b16 %v614
  %v815 = vunpack.c.l.b16 %v615
  %v816 = vunpack.c.h.b16 %v615
  %v817 = vunpack.c.l.b16 %v616
  %v818 = vunpack.c.h.b16 %v616
  %v819 = vunpack.c.l.b16 %v617
  %v820 = vunpack.c.h.b16 %v617
  %v821 = vunpack.c.l.b16 %v618
  %v822 = vunpack.c.h.b16 %v618
  %v823 = vpack.c.b16 %v697, %v695
  %v824 = vpack.c.b16 %v698, %v696
  %v825 = vpack.c.b16 %v701, %v699
  %v826 = vpack.c.b16 %v702, %v700
  %v827 = vpack.c.b16 %v705, %v703
  %v828 = vpack.c.b16 %v706, %v704
  %v829 = vpack.c.b16 %v709, %v707
  %v830 = vpack.c.b16 %v710, %v708
  %v831 = vpack.c.b16 %v713, %v711
  %v832 = vpack.c.b16 %v714, %v712
  %v833 = vpack.c.b16 %v717, %v715
  %v834 = vpack.c.b16 %v718, %v716
  %v835 = vpack.c.b16 %v721, %v719
  %v836 = vpack.c.b16 %v722, %v720
  %v837 = vpack.c.b16 %v725, %v723
  %v838 = vpack.c.b16 %v726, %v724
  %v839 = vpack.c.b16 %v729, %v727
  %v840 = vpack.c.b16 %v730, %v728
  %v841 = vpack.c.b16 %v733, %v731
  %v842 = vpack.c.b16 %v734, %v732
  %v843 = vpack.c.b16 %v737, %v735
  %v844 = vpack.c.b16 %v738, %v736
  %v845 = vpack.c.b16 %v741, %v739
  %v846 = vpack.c.b16 %v742, %v740
  %v847 = vpack.c.b16 %v745, %v743
  %v848 = vpack.c.b16 %v746, %v744
  %v849 = vpack.c.b16 %v749, %v747
  %v850 = vpack.c.b16 %v750, %v748
  %v851 = vpack.c.b16 %v753, %v751
  %v852 = vpack.c.b16 %v754, %v752
  %v853 = vpack.c.b16 %v757, %v755
  %v854 = vpack.c.b16 %v758, %v756
  %v855 = vpack.c.b16 %v761, %v759
  %v856 = vpack.c.b16 %v762, %v760
  %v857 = vpack.c.b16 %v765, %v763
  %v858 = vpack.c.b16 %v766, %v764
  %v859 = vpack.c.b16 %v769, %v767
  %v860 = vpack.c.b16 %v770, %v768
  %v861 = vpack.c.b16 %v773, %v771
  %v862 = vpack.c.b16 %v774, %v772
  %v863 = vpack.c.b16 %v777, %v775
  %v864 = vpack.c.b16 %v778, %v776
  %v865 = vpack.c.b16 %v781, %v779
  %v866 = vpack.c.b16 %v782, %v780
  %v867 = vpack.c.b16 %v785, %v783
  %v868 = vpack.c.b16 %v786, %v784
  %v869 = vpack.c.b16 %v789, %v787
  %v870 = vpack.c.b16 %v790, %v788
  %v871 = vpack.c.b16 %v793, %v791
  %v872 = vpack.c.b16 %v794, %v792
  %v873 = vpack.c.b16 %v797, %v795
  %v874 = vpack.c.b16 %v798, %v796
  %v875 = vpack.c.b16 %v801, %v799
  %v876 = vpack.c.b16 %v802, %v800
  %v877 = vpack.c.b16 %v805, %v803
  %v878 = vpack.c.b16 %v806, %v804
  %v879 = vpack.c.b16 %v809, %v807
  %v880 = vpack.c.b16 %v810, %v808
  %v881 = vpack.c.b16 %v813, %v811
  %v882 = vpack.c.b16 %v814, %v812
  %v883 = vpack.c.b16 %v817, %v815
  %v884 = vpack.c.b16 %v818, %v816
  %v885 = vpack.c.b16 %v821, %v819
  %v886 = vpack.c.b16 %v822, %v820
  %951 = vmatprep.subr.bf16.mxu0 %v824
  %952 = vmatpush1.bf16.msra.mxu0 %v823
  %953 = vmatprep.subr.bf16.mxu0 %v826
  %954 = vmatpush1.bf16.msra.mxu0 %v825
  %955 = vmatprep.subr.bf16.mxu0 %v828
  %956 = vmatpush1.bf16.msra.mxu0 %v827
  %957 = vmatprep.subr.bf16.mxu0 %v830
  %958 = vmatpush1.bf16.msra.mxu0 %v829
  %959 = vmatprep.subr.bf16.mxu0 %v832
  %960 = vmatpush1.bf16.msra.mxu0 %v831
  %961 = vmatprep.subr.bf16.mxu0 %v834
  %962 = vmatpush1.bf16.msra.mxu0 %v833
  %963 = vmatprep.subr.bf16.mxu0 %v836
  %964 = vmatpush1.bf16.msra.mxu0 %v835
  %965 = vmatprep.subr.bf16.mxu0 %v838
  %966 = vmatpush1.bf16.msra.mxu0 %v837
  %967 = vmatprep.subr.bf16.mxu0 %v840
  %968 = vmatpush1.bf16.msra.mxu0 %v839
  %969 = vmatprep.subr.bf16.mxu0 %v842
  %970 = vmatpush1.bf16.msra.mxu0 %v841
  %971 = vmatprep.subr.bf16.mxu0 %v844
  %972 = vmatpush1.bf16.msra.mxu0 %v843
  %973 = vmatprep.subr.bf16.mxu0 %v846
  %974 = vmatpush1.bf16.msra.mxu0 %v845
  %975 = vmatprep.subr.bf16.mxu0 %v848
  %976 = vmatpush1.bf16.msra.mxu0 %v847
  %977 = vmatprep.subr.bf16.mxu0 %v850
  %978 = vmatpush1.bf16.msra.mxu0 %v849
  %979 = vmatprep.subr.bf16.mxu0 %v852
  %980 = vmatpush1.bf16.msra.mxu0 %v851
  %981 = vmatprep.subr.bf16.mxu0 %v854
  %982 = vmatpush1.bf16.msra.mxu0 %v853
  %983 = vmatprep.mubr.bf16.mxu0 %v552
  %984 = vmatmul.mubr.bf16.gmra.mrb[0].mxu0 %v551
  %v985 = vpop.f32.mrb[0].mxu0
  %v986 = vadd.f32 %v624, %v985
  %v987 = vpop.f32.mrb[0].mxu0
  %v988 = vadd.f32 %v628, %v987
  %v989 = vpop.f32.mrb[0].mxu0
  %v990 = vpop.f32.mrb[0].mxu0
  %991 = vdwg.mxu0
  %992 = vmatprep.subr.bf16.mxu0 %v856
  %993 = vmatpush1.bf16.msra.mxu0 %v855
  %994 = vmatprep.subr.bf16.mxu0 %v858
  %995 = vmatpush1.bf16.msra.mxu0 %v857
  %996 = vmatprep.subr.bf16.mxu0 %v860
  %997 = vmatpush1.bf16.msra.mxu0 %v859
  %998 = vmatprep.subr.bf16.mxu0 %v862
  %999 = vmatpush1.bf16.msra.mxu0 %v861
  %1000 = vmatprep.subr.bf16.mxu0 %v864
  %1001 = vmatpush1.bf16.msra.mxu0 %v863
  %1002 = vmatprep.subr.bf16.mxu0 %v866
  %1003 = vmatpush1.bf16.msra.mxu0 %v865
  %1004 = vmatprep.subr.bf16.mxu0 %v868
  %1005 = vmatpush1.bf16.msra.mxu0 %v867
  %1006 = vmatprep.subr.bf16.mxu0 %v870
  %1007 = vmatpush1.bf16.msra.mxu0 %v869
  %1008 = vmatprep.subr.bf16.mxu0 %v872
  %1009 = vmatpush1.bf16.msra.mxu0 %v871
  %1010 = vmatprep.subr.bf16.mxu0 %v874
  %1011 = vmatpush1.bf16.msra.mxu0 %v873
  %1012 = vmatprep.subr.bf16.mxu0 %v876
  %1013 = vmatpush1.bf16.msra.mxu0 %v875
  %1014 = vmatprep.subr.bf16.mxu0 %v878
  %1015 = vmatpush1.bf16.msra.mxu0 %v877
  %1016 = vmatprep.subr.bf16.mxu0 %v880
  %1017 = vmatpush1.bf16.msra.mxu0 %v879
  %1018 = vmatprep.subr.bf16.mxu0 %v882
  %1019 = vmatpush1.bf16.msra.mxu0 %v881
  %1020 = vmatprep.subr.bf16.mxu0 %v884
  %1021 = vmatpush1.bf16.msra.mxu0 %v883
  %1022 = vmatprep.subr.bf16.mxu0 %v886
  %1023 = vmatpush1.bf16.msra.mxu0 %v885
  %1024 = vmatprep.mubr.bf16.mxu0 %v554
  %1025 = vmatmul.mubr.bf16.gmra.mrb[0].mxu0 %v553
  %v1026 = vpop.f32.mrb[0].mxu0
  %v1027 = vadd.f32 %v986, %v1026
  %v1028 = vpop.f32.mrb[0].mxu0
  %v1029 = vadd.f32 %v988, %v1028
  %v1030 = vpop.f32.mrb[0].mxu0
  %v1031 = vpop.f32.mrb[0].mxu0
  %1032 = vdwg.mxu0
  %vm1033 = vcmp.gt.f32.partialorder %v1027, 0.0
  %vm1034 = vcmp.gt.f32.partialorder %v1029, 0.0
  %v1035 = vmul.f32 %v1027, 0.2
  %v1036 = vmul.f32 %v1029, 0.2
  %v1037 = vsel %vm1033, %v1027, %v1035
  %v1038 = vsel %vm1034, %v1029, %v1036
  %v1039 = vpack.c.bf16 %v1037, %v1037
  %v1040 = vpack.c.bf16 %v1038, %v1038
  %v1041 = vld [vmem:[%s5] sm:$0xff]
  %v1042 = vld [vmem:[%s5 + $0x8] sm:$0xff]
  %v1043 = vld [vmem:[%s5 + $0x10] sm:$0xff]
  %v1044 = vld [vmem:[%s5 + $0x18] sm:$0xff]
  %v1045 = vld [vmem:[%s5 + $0x20] sm:$0xff]
  %v1046 = vld [vmem:[%s5 + $0x28] sm:$0xff]
  %v1047 = vld [vmem:[%s5 + $0x30] sm:$0xff]
  %v1048 = vld [vmem:[%s5 + $0x38] sm:$0xff]
  %v1049 = vld [vmem:[%s5 + $0x40] sm:$0xff]
  %v1050 = vld [vmem:[%s5 + $0x48] sm:$0xff]
  %v1051 = vld [vmem:[%s5 + $0x50] sm:$0xff]
  %v1052 = vld [vmem:[%s5 + $0x58] sm:$0xff]
  %v1053 = vld [vmem:[%s5 + $0x60] sm:$0xff]
  %v1054 = vld [vmem:[%s5 + $0x68] sm:$0xff]
  %v1055 = vld [vmem:[%s5 + $0x70] sm:$0xff]
  %v1056 = vld [vmem:[%s5 + $0x78] sm:$0xff]
  %v1057 = vld [vmem:[%s5 + $0x80] sm:$0xff]
  %v1058 = vld [vmem:[%s5 + $0x88] sm:$0xff]
  %v1059 = vld [vmem:[%s5 + $0x90] sm:$0xff]
  %v1060 = vld [vmem:[%s5 + $0x98] sm:$0xff]
  %v1061 = vld [vmem:[%s5 + $0xa0] sm:$0xff]
  %v1062 = vld [vmem:[%s5 + $0xa8] sm:$0xff]
  %v1063 = vld [vmem:[%s5 + $0xb0] sm:$0xff]
  %v1064 = vld [vmem:[%s5 + $0xb8] sm:$0xff]
  %v1065 = vld [vmem:[%s5 + $0xc0] sm:$0xff]
  %v1066 = vld [vmem:[%s5 + $0xc8] sm:$0xff]
  %v1067 = vld [vmem:[%s5 + $0xd0] sm:$0xff]
  %v1068 = vld [vmem:[%s5 + $0xd8] sm:$0xff]
  %v1069 = vld [vmem:[%s5 + $0xe0] sm:$0xff]
  %v1070 = vld [vmem:[%s5 + $0xe8] sm:$0xff]
  %v1071 = vld [vmem:[%s5 + $0xf0] sm:$0xff]
  %v1072 = vld [vmem:[%s5 + $0xf8] sm:$0xff]
  %v1073 = vld [vmem:[%s6] sm:$0x3]
  %v1075 = vlaneseq
  %v1076 = vshrl.u32 %v1075, 7
  %v1077 = vsub.s32 0, %v1076
  %v1078 = vrot.slane %v1073, %v1077
  %v1079 = vlaneseq
  %v1080 = vshrl.u32 %v1079, 7
  %v1081 = vsub.s32 1, %v1080
  %v1082 = vrot.slane %v1073, %v1081
  %v1117 = vunpack.c.l.b16 %v1041
  %v1118 = vunpack.c.h.b16 %v1041
  %v1119 = vunpack.c.l.b16 %v1042
  %v1120 = vunpack.c.h.b16 %v1042
  %v1121 = vunpack.c.l.b16 %v1043
  %v1122 = vunpack.c.h.b16 %v1043
  %v1123 = vunpack.c.l.b16 %v1044
  %v1124 = vunpack.c.h.b16 %v1044
  %v1125 = vunpack.c.l.b16 %v1045
  %v1126 = vunpack.c.h.b16 %v1045
  %v1127 = vunpack.c.l.b16 %v1046
  %v1128 = vunpack.c.h.b16 %v1046
  %v1129 = vunpack.c.l.b16 %v1047
  %v1130 = vunpack.c.h.b16 %v1047
  %v1131 = vunpack.c.l.b16 %v1048
  %v1132 = vunpack.c.h.b16 %v1048
  %v1133 = vunpack.c.l.b16 %v1049
  %v1134 = vunpack.c.h.b16 %v1049
  %v1135 = vunpack.c.l.b16 %v1050
  %v1136 = vunpack.c.h.b16 %v1050
  %v1137 = vunpack.c.l.b16 %v1051
  %v1138 = vunpack.c.h.b16 %v1051
  %v1139 = vunpack.c.l.b16 %v1052
  %v1140 = vunpack.c.h.b16 %v1052
  %v1141 = vunpack.c.l.b16 %v1053
  %v1142 = vunpack.c.h.b16 %v1053
  %v1143 = vunpack.c.l.b16 %v1054
  %v1144 = vunpack.c.h.b16 %v1054
  %v1145 = vunpack.c.l.b16 %v1055
  %v1146 = vunpack.c.h.b16 %v1055
  %v1147 = vunpack.c.l.b16 %v1056
  %v1148 = vunpack.c.h.b16 %v1056
  %v1149 = vunpack.c.l.b16 %v1057
  %v1150 = vunpack.c.h.b16 %v1057
  %v1151 = vunpack.c.l.b16 %v1058
  %v1152 = vunpack.c.h.b16 %v1058
  %v1153 = vunpack.c.l.b16 %v1059
  %v1154 = vunpack.c.h.b16 %v1059
  %v1155 = vunpack.c.l.b16 %v1060
  %v1156 = vunpack.c.h.b16 %v1060
  %v1157 = vunpack.c.l.b16 %v1061
  %v1158 = vunpack.c.h.b16 %v1061
  %v1159 = vunpack.c.l.b16 %v1062
  %v1160 = vunpack.c.h.b16 %v1062
  %v1161 = vunpack.c.l.b16 %v1063
  %v1162 = vunpack.c.h.b16 %v1063
  %v1163 = vunpack.c.l.b16 %v1064
  %v1164 = vunpack.c.h.b16 %v1064
  %v1165 = vunpack.c.l.b16 %v1065
  %v1166 = vunpack.c.h.b16 %v1065
  %v1167 = vunpack.c.l.b16 %v1066
  %v1168 = vunpack.c.h.b16 %v1066
  %v1169 = vunpack.c.l.b16 %v1067
  %v1170 = vunpack.c.h.b16 %v1067
  %v1171 = vunpack.c.l.b16 %v1068
  %v1172 = vunpack.c.h.b16 %v1068
  %v1173 = vunpack.c.l.b16 %v1069
  %v1174 = vunpack.c.h.b16 %v1069
  %v1175 = vunpack.c.l.b16 %v1070
  %v1176 = vunpack.c.h.b16 %v1070
  %v1177 = vunpack.c.l.b16 %v1071
  %v1178 = vunpack.c.h.b16 %v1071
  %v1179 = vunpack.c.l.b16 %v1072
  %v1180 = vunpack.c.h.b16 %v1072
  %v1181 = vpack.c.b16 %v1119, %v1117
  %v1182 = vpack.c.b16 %v1120, %v1118
  %v1183 = vpack.c.b16 %v1123, %v1121
  %v1184 = vpack.c.b16 %v1124, %v1122
  %v1185 = vpack.c.b16 %v1127, %v1125
  %v1186 = vpack.c.b16 %v1128, %v1126
  %v1187 = vpack.c.b16 %v1131, %v1129
  %v1188 = vpack.c.b16 %v1132, %v1130
  %v1189 = vpack.c.b16 %v1135, %v1133
  %v1190 = vpack.c.b16 %v1136, %v1134
  %v1191 = vpack.c.b16 %v1139, %v1137
  %v1192 = vpack.c.b16 %v1140, %v1138
  %v1193 = vpack.c.b16 %v1143, %v1141
  %v1194 = vpack.c.b16 %v1144, %v1142
  %v1195 = vpack.c.b16 %v1147, %v1145
  %v1196 = vpack.c.b16 %v1148, %v1146
  %v1197 = vpack.c.b16 %v1151, %v1149
  %v1198 = vpack.c.b16 %v1152, %v1150
  %v1199 = vpack.c.b16 %v1155, %v1153
  %v1200 = vpack.c.b16 %v1156, %v1154
  %v1201 = vpack.c.b16 %v1159, %v1157
  %v1202 = vpack.c.b16 %v1160, %v1158
  %v1203 = vpack.c.b16 %v1163, %v1161
  %v1204 = vpack.c.b16 %v1164, %v1162
  %v1205 = vpack.c.b16 %v1167, %v1165
  %v1206 = vpack.c.b16 %v1168, %v1166
  %v1207 = vpack.c.b16 %v1171, %v1169
  %v1208 = vpack.c.b16 %v1172, %v1170
  %v1209 = vpack.c.b16 %v1175, %v1173
  %v1210 = vpack.c.b16 %v1176, %v1174
  %v1211 = vpack.c.b16 %v1179, %v1177
  %v1212 = vpack.c.b16 %v1180, %v1178
  %1245 = vmatprep.subr.bf16.mxu0 %v1182
  %1246 = vmatpush1.bf16.msra.mxu0 %v1181
  %1247 = vmatprep.subr.bf16.mxu0 %v1184
  %1248 = vmatpush1.bf16.msra.mxu0 %v1183
  %1249 = vmatprep.subr.bf16.mxu0 %v1186
  %1250 = vmatpush1.bf16.msra.mxu0 %v1185
  %1251 = vmatprep.subr.bf16.mxu0 %v1188
  %1252 = vmatpush1.bf16.msra.mxu0 %v1187
  %1253 = vmatprep.subr.bf16.mxu0 %v1190
  %1254 = vmatpush1.bf16.msra.mxu0 %v1189
  %1255 = vmatprep.subr.bf16.mxu0 %v1192
  %1256 = vmatpush1.bf16.msra.mxu0 %v1191
  %1257 = vmatprep.subr.bf16.mxu0 %v1194
  %1258 = vmatpush1.bf16.msra.mxu0 %v1193
  %1259 = vmatprep.subr.bf16.mxu0 %v1196
  %1260 = vmatpush1.bf16.msra.mxu0 %v1195
  %1261 = vmatprep.subr.bf16.mxu0 %v1198
  %1262 = vmatpush1.bf16.msra.mxu0 %v1197
  %1263 = vmatprep.subr.bf16.mxu0 %v1200
  %1264 = vmatpush1.bf16.msra.mxu0 %v1199
  %1265 = vmatprep.subr.bf16.mxu0 %v1202
  %1266 = vmatpush1.bf16.msra.mxu0 %v1201
  %1267 = vmatprep.subr.bf16.mxu0 %v1204
  %1268 = vmatpush1.bf16.msra.mxu0 %v1203
  %1269 = vmatprep.subr.bf16.mxu0 %v1206
  %1270 = vmatpush1.bf16.msra.mxu0 %v1205
  %1271 = vmatprep.subr.bf16.mxu0 %v1208
  %1272 = vmatpush1.bf16.msra.mxu0 %v1207
  %1273 = vmatprep.subr.bf16.mxu0 %v1210
  %1274 = vmatpush1.bf16.msra.mxu0 %v1209
  %1275 = vmatprep.subr.bf16.mxu0 %v1212
  %1276 = vmatpush1.bf16.msra.mxu0 %v1211
  %1277 = vmatprep.mubr.bf16.mxu0 %v1040
  %1278 = vmatmul.mubr.bf16.gmra.mrb[0].mxu0 %v1039
  %v1279 = vpop.f32.mrb[0].mxu0
  %v1280 = vadd.f32 %v1078, %v1279
  %v1281 = vpop.f32.mrb[0].mxu0
  %v1282 = vadd.f32 %v1082, %v1281
  %v1283 = vpop.f32.mrb[0].mxu0
  %v1284 = vpop.f32.mrb[0].mxu0
  %1285 = vdwg.mxu0
  %1286 = vst [vmem:[%s13] sm:$0xff] %v1280
  %1287 = vst [vmem:[%s13 + $0x8] sm:$0xff] %v1282
  %v1288 = vpack.c.bf16 %v1280, %v1280
  %v1289 = vld [vmem:[%s7] sm:$0xff]
  %v1290 = vld [vmem:[%s7 + $0x8] sm:$0xff]
  %v1291 = vld [vmem:[%s7 + $0x10] sm:$0xff]
  %v1292 = vld [vmem:[%s7 + $0x18] sm:$0xff]
  %v1293 = vld [vmem:[%s7 + $0x20] sm:$0xff]
  %v1294 = vld [vmem:[%s7 + $0x28] sm:$0xff]
  %v1295 = vld [vmem:[%s7 + $0x30] sm:$0xff]
  %v1296 = vld [vmem:[%s7 + $0x38] sm:$0xff]
  %v1297 = vld [vmem:[%s7 + $0x40] sm:$0xff]
  %v1298 = vld [vmem:[%s7 + $0x48] sm:$0xff]
  %v1299 = vld [vmem:[%s7 + $0x50] sm:$0xff]
  %v1300 = vld [vmem:[%s7 + $0x58] sm:$0xff]
  %v1301 = vld [vmem:[%s7 + $0x60] sm:$0xff]
  %v1302 = vld [vmem:[%s7 + $0x68] sm:$0xff]
  %v1303 = vld [vmem:[%s7 + $0x70] sm:$0xff]
  %v1304 = vld [vmem:[%s7 + $0x78] sm:$0xff]
  %v1305 = vld [vmem:[%s8] sm:$0x3]
  %v1307 = vlaneseq
  %v1308 = vshrl.u32 %v1307, 7
  %v1309 = vsub.s32 0, %v1308
  %v1310 = vrot.slane %v1305, %v1309
  %v1311 = vlaneseq
  %v1312 = vshrl.u32 %v1311, 7
  %v1313 = vsub.s32 1, %v1312
  %v1314 = vrot.slane %v1305, %v1313
  %v1333 = vunpack.c.l.b16 %v1289
  %v1334 = vunpack.c.h.b16 %v1289
  %v1335 = vunpack.c.l.b16 %v1290
  %v1336 = vunpack.c.h.b16 %v1290
  %v1337 = vunpack.c.l.b16 %v1291
  %v1338 = vunpack.c.h.b16 %v1291
  %v1339 = vunpack.c.l.b16 %v1292
  %v1340 = vunpack.c.h.b16 %v1292
  %v1341 = vunpack.c.l.b16 %v1293
  %v1342 = vunpack.c.h.b16 %v1293
  %v1343 = vunpack.c.l.b16 %v1294
  %v1344 = vunpack.c.h.b16 %v1294
  %v1345 = vunpack.c.l.b16 %v1295
  %v1346 = vunpack.c.h.b16 %v1295
  %v1347 = vunpack.c.l.b16 %v1296
  %v1348 = vunpack.c.h.b16 %v1296
  %v1349 = vunpack.c.l.b16 %v1297
  %v1350 = vunpack.c.h.b16 %v1297
  %v1351 = vunpack.c.l.b16 %v1298
  %v1352 = vunpack.c.h.b16 %v1298
  %v1353 = vunpack.c.l.b16 %v1299
  %v1354 = vunpack.c.h.b16 %v1299
  %v1355 = vunpack.c.l.b16 %v1300
  %v1356 = vunpack.c.h.b16 %v1300
  %v1357 = vunpack.c.l.b16 %v1301
  %v1358 = vunpack.c.h.b16 %v1301
  %v1359 = vunpack.c.l.b16 %v1302
  %v1360 = vunpack.c.h.b16 %v1302
  %v1361 = vunpack.c.l.b16 %v1303
  %v1362 = vunpack.c.h.b16 %v1303
  %v1363 = vunpack.c.l.b16 %v1304
  %v1364 = vunpack.c.h.b16 %v1304
  %v1365 = vpack.c.b16 %v1335, %v1333
  %v1366 = vpack.c.b16 %v1336, %v1334
  %v1367 = vpack.c.b16 %v1339, %v1337
  %v1368 = vpack.c.b16 %v1340, %v1338
  %v1369 = vpack.c.b16 %v1343, %v1341
  %v1370 = vpack.c.b16 %v1344, %v1342
  %v1371 = vpack.c.b16 %v1347, %v1345
  %v1372 = vpack.c.b16 %v1348, %v1346
  %v1373 = vpack.c.b16 %v1351, %v1349
  %v1374 = vpack.c.b16 %v1352, %v1350
  %v1375 = vpack.c.b16 %v1355, %v1353
  %v1376 = vpack.c.b16 %v1356, %v1354
  %v1377 = vpack.c.b16 %v1359, %v1357
  %v1378 = vpack.c.b16 %v1360, %v1358
  %v1379 = vpack.c.b16 %v1363, %v1361
  %v1380 = vpack.c.b16 %v1364, %v1362
  %1397 = vmatprep.subr.bf16.mxu0 %v1366
  %1398 = vmatpush1.bf16.msra.mxu0 %v1365
  %1399 = vmatprep.subr.bf16.mxu0 %v1368
  %1400 = vmatpush1.bf16.msra.mxu0 %v1367
  %1401 = vmatprep.subr.bf16.mxu0 %v1370
  %1402 = vmatpush1.bf16.msra.mxu0 %v1369
  %1403 = vmatprep.subr.bf16.mxu0 %v1372
  %1404 = vmatpush1.bf16.msra.mxu0 %v1371
  %1405 = vmatprep.subr.bf16.mxu0 %v1374
  %1406 = vmatpush1.bf16.msra.mxu0 %v1373
  %1407 = vmatprep.subr.bf16.mxu0 %v1376
  %1408 = vmatpush1.bf16.msra.mxu0 %v1375
  %1409 = vmatprep.subr.bf16.mxu0 %v1378
  %1410 = vmatpush1.bf16.msra.mxu0 %v1377
  %1411 = vmatprep.subr.bf16.mxu0 %v1380
  %1412 = vmatpush1.bf16.msra.mxu0 %v1379
  %1413 = vmatprep.subr.bf16.mxu0 0
  %1414 = vmatpush1.bf16.msra.mxu0 0
  %1415 = vmatprep.subr.bf16.mxu0 0
  %1416 = vmatpush1.bf16.msra.mxu0 0
  %1417 = vmatprep.subr.bf16.mxu0 0
  %1418 = vmatpush1.bf16.msra.mxu0 0
  %1419 = vmatprep.subr.bf16.mxu0 0
  %1420 = vmatpush1.bf16.msra.mxu0 0
  %1421 = vmatprep.subr.bf16.mxu0 0
  %1422 = vmatpush1.bf16.msra.mxu0 0
  %1423 = vmatprep.subr.bf16.mxu0 0
  %1424 = vmatpush1.bf16.msra.mxu0 0
  %1425 = vmatprep.subr.bf16.mxu0 0
  %1426 = vmatpush1.bf16.msra.mxu0 0
  %1427 = vmatprep.subr.bf16.mxu0 0
  %1428 = vmatpush1.bf16.msra.mxu0 0
  %1429 = vmatprep.mubr.bf16.mxu0 0
  %1430 = vmatmul.mubr.bf16.gmra.mrb[0].mxu0 %v1288
  %v1431 = vpop.f32.mrb[0].mxu0
  %v1432 = vadd.f32 %v1310, %v1431
  %v1433 = vpop.f32.mrb[0].mxu0
  %v1434 = vadd.f32 %v1314, %v1433
  %v1435 = vpop.f32.mrb[0].mxu0
  %v1436 = vpop.f32.mrb[0].mxu0
  %1437 = vdwg.mxu0
  %vm1438 = vcmp.gt.f32.partialorder %v1432, 0.0
  %vm1439 = vcmp.gt.f32.partialorder %v1434, 0.0
  %v1440 = vmul.f32 %v1432, 0.2
  %v1441 = vmul.f32 %v1434, 0.2
  %v1442 = vsel %vm1438, %v1432, %v1440
  %v1443 = vsel %vm1439, %v1434, %v1441
  %v1444 = vpack.c.bf16 %v1442, %v1442
  %v1445 = vpack.c.bf16 %v1443, %v1443
  %v1446 = vld [vmem:[%s9] sm:$0xff]
  %v1447 = vld [vmem:[%s9 + $0x8] sm:$0xff]
  %v1448 = vld [vmem:[%s9 + $0x10] sm:$0xff]
  %v1449 = vld [vmem:[%s9 + $0x18] sm:$0xff]
  %v1450 = vld [vmem:[%s9 + $0x20] sm:$0xff]
  %v1451 = vld [vmem:[%s9 + $0x28] sm:$0xff]
  %v1452 = vld [vmem:[%s9 + $0x30] sm:$0xff]
  %v1453 = vld [vmem:[%s9 + $0x38] sm:$0xff]
  %v1454 = vld [vmem:[%s9 + $0x40] sm:$0xff]
  %v1455 = vld [vmem:[%s9 + $0x48] sm:$0xff]
  %v1456 = vld [vmem:[%s9 + $0x50] sm:$0xff]
  %v1457 = vld [vmem:[%s9 + $0x58] sm:$0xff]
  %v1458 = vld [vmem:[%s9 + $0x60] sm:$0xff]
  %v1459 = vld [vmem:[%s9 + $0x68] sm:$0xff]
  %v1460 = vld [vmem:[%s9 + $0x70] sm:$0xff]
  %v1461 = vld [vmem:[%s9 + $0x78] sm:$0xff]
  %v1462 = vld [vmem:[%s9 + $0x80] sm:$0xff]
  %v1463 = vld [vmem:[%s9 + $0x88] sm:$0xff]
  %v1464 = vld [vmem:[%s9 + $0x90] sm:$0xff]
  %v1465 = vld [vmem:[%s9 + $0x98] sm:$0xff]
  %v1466 = vld [vmem:[%s9 + $0xa0] sm:$0xff]
  %v1467 = vld [vmem:[%s9 + $0xa8] sm:$0xff]
  %v1468 = vld [vmem:[%s9 + $0xb0] sm:$0xff]
  %v1469 = vld [vmem:[%s9 + $0xb8] sm:$0xff]
  %v1470 = vld [vmem:[%s9 + $0xc0] sm:$0xff]
  %v1471 = vld [vmem:[%s9 + $0xc8] sm:$0xff]
  %v1472 = vld [vmem:[%s9 + $0xd0] sm:$0xff]
  %v1473 = vld [vmem:[%s9 + $0xd8] sm:$0xff]
  %v1474 = vld [vmem:[%s9 + $0xe0] sm:$0xff]
  %v1475 = vld [vmem:[%s9 + $0xe8] sm:$0xff]
  %v1476 = vld [vmem:[%s9 + $0xf0] sm:$0xff]
  %v1477 = vld [vmem:[%s9 + $0xf8] sm:$0xff]
  %v1478 = vld [vmem:[%s9 + $0x100] sm:$0xff]
  %v1479 = vld [vmem:[%s9 + $0x108] sm:$0xff]
  %v1480 = vld [vmem:[%s9 + $0x110] sm:$0xff]
  %v1481 = vld [vmem:[%s9 + $0x118] sm:$0xff]
  %v1482 = vld [vmem:[%s9 + $0x120] sm:$0xff]
  %v1483 = vld [vmem:[%s9 + $0x128] sm:$0xff]
  %v1484 = vld [vmem:[%s9 + $0x130] sm:$0xff]
  %v1485 = vld [vmem:[%s9 + $0x138] sm:$0xff]
  %v1486 = vld [vmem:[%s9 + $0x140] sm:$0xff]
  %v1487 = vld [vmem:[%s9 + $0x148] sm:$0xff]
  %v1488 = vld [vmem:[%s9 + $0x150] sm:$0xff]
  %v1489 = vld [vmem:[%s9 + $0x158] sm:$0xff]
  %v1490 = vld [vmem:[%s9 + $0x160] sm:$0xff]
  %v1491 = vld [vmem:[%s9 + $0x168] sm:$0xff]
  %v1492 = vld [vmem:[%s9 + $0x170] sm:$0xff]
  %v1493 = vld [vmem:[%s9 + $0x178] sm:$0xff]
  %v1494 = vld [vmem:[%s9 + $0x180] sm:$0xff]
  %v1495 = vld [vmem:[%s9 + $0x188] sm:$0xff]
  %v1496 = vld [vmem:[%s9 + $0x190] sm:$0xff]
  %v1497 = vld [vmem:[%s9 + $0x198] sm:$0xff]
  %v1498 = vld [vmem:[%s9 + $0x1a0] sm:$0xff]
  %v1499 = vld [vmem:[%s9 + $0x1a8] sm:$0xff]
  %v1500 = vld [vmem:[%s9 + $0x1b0] sm:$0xff]
  %v1501 = vld [vmem:[%s9 + $0x1b8] sm:$0xff]
  %v1502 = vld [vmem:[%s9 + $0x1c0] sm:$0xff]
  %v1503 = vld [vmem:[%s9 + $0x1c8] sm:$0xff]
  %v1504 = vld [vmem:[%s9 + $0x1d0] sm:$0xff]
  %v1505 = vld [vmem:[%s9 + $0x1d8] sm:$0xff]
  %v1506 = vld [vmem:[%s9 + $0x1e0] sm:$0xff]
  %v1507 = vld [vmem:[%s9 + $0x1e8] sm:$0xff]
  %v1508 = vld [vmem:[%s9 + $0x1f0] sm:$0xff]
  %v1509 = vld [vmem:[%s9 + $0x1f8] sm:$0xff]
  %v1510 = vld [vmem:[%s10] sm:$0xf]
  %v1512 = vlaneseq
  %v1513 = vshrl.u32 %v1512, 7
  %v1514 = vsub.s32 0, %v1513
  %v1515 = vrot.slane %v1510, %v1514
  %v1516 = vlaneseq
  %v1517 = vshrl.u32 %v1516, 7
  %v1518 = vsub.s32 1, %v1517
  %v1519 = vrot.slane %v1510, %v1518
  %v1520 = vlaneseq
  %v1521 = vshrl.u32 %v1520, 7
  %v1522 = vsub.s32 2, %v1521
  %v1523 = vrot.slane %v1510, %v1522
  %v1524 = vlaneseq
  %v1525 = vshrl.u32 %v1524, 7
  %v1526 = vsub.s32 3, %v1525
  %v1527 = vrot.slane %v1510, %v1526
  %v1596 = vunpack.c.l.b16 %v1446
  %v1597 = vunpack.c.h.b16 %v1446
  %v1598 = vunpack.c.l.b16 %v1447
  %v1599 = vunpack.c.h.b16 %v1447
  %v1600 = vunpack.c.l.b16 %v1448
  %v1601 = vunpack.c.h.b16 %v1448
  %v1602 = vunpack.c.l.b16 %v1449
  %v1603 = vunpack.c.h.b16 %v1449
  %v1604 = vunpack.c.l.b16 %v1450
  %v1605 = vunpack.c.h.b16 %v1450
  %v1606 = vunpack.c.l.b16 %v1451
  %v1607 = vunpack.c.h.b16 %v1451
  %v1608 = vunpack.c.l.b16 %v1452
  %v1609 = vunpack.c.h.b16 %v1452
  %v1610 = vunpack.c.l.b16 %v1453
  %v1611 = vunpack.c.h.b16 %v1453
  %v1612 = vunpack.c.l.b16 %v1454
  %v1613 = vunpack.c.h.b16 %v1454
  %v1614 = vunpack.c.l.b16 %v1455
  %v1615 = vunpack.c.h.b16 %v1455
  %v1616 = vunpack.c.l.b16 %v1456
  %v1617 = vunpack.c.h.b16 %v1456
  %v1618 = vunpack.c.l.b16 %v1457
  %v1619 = vunpack.c.h.b16 %v1457
  %v1620 = vunpack.c.l.b16 %v1458
  %v1621 = vunpack.c.h.b16 %v1458
  %v1622 = vunpack.c.l.b16 %v1459
  %v1623 = vunpack.c.h.b16 %v1459
  %v1624 = vunpack.c.l.b16 %v1460
  %v1625 = vunpack.c.h.b16 %v1460
  %v1626 = vunpack.c.l.b16 %v1461
  %v1627 = vunpack.c.h.b16 %v1461
  %v1628 = vunpack.c.l.b16 %v1462
  %v1629 = vunpack.c.h.b16 %v1462
  %v1630 = vunpack.c.l.b16 %v1463
  %v1631 = vunpack.c.h.b16 %v1463
  %v1632 = vunpack.c.l.b16 %v1464
  %v1633 = vunpack.c.h.b16 %v1464
  %v1634 = vunpack.c.l.b16 %v1465
  %v1635 = vunpack.c.h.b16 %v1465
  %v1636 = vunpack.c.l.b16 %v1466
  %v1637 = vunpack.c.h.b16 %v1466
  %v1638 = vunpack.c.l.b16 %v1467
  %v1639 = vunpack.c.h.b16 %v1467
  %v1640 = vunpack.c.l.b16 %v1468
  %v1641 = vunpack.c.h.b16 %v1468
  %v1642 = vunpack.c.l.b16 %v1469
  %v1643 = vunpack.c.h.b16 %v1469
  %v1644 = vunpack.c.l.b16 %v1470
  %v1645 = vunpack.c.h.b16 %v1470
  %v1646 = vunpack.c.l.b16 %v1471
  %v1647 = vunpack.c.h.b16 %v1471
  %v1648 = vunpack.c.l.b16 %v1472
  %v1649 = vunpack.c.h.b16 %v1472
  %v1650 = vunpack.c.l.b16 %v1473
  %v1651 = vunpack.c.h.b16 %v1473
  %v1652 = vunpack.c.l.b16 %v1474
  %v1653 = vunpack.c.h.b16 %v1474
  %v1654 = vunpack.c.l.b16 %v1475
  %v1655 = vunpack.c.h.b16 %v1475
  %v1656 = vunpack.c.l.b16 %v1476
  %v1657 = vunpack.c.h.b16 %v1476
  %v1658 = vunpack.c.l.b16 %v1477
  %v1659 = vunpack.c.h.b16 %v1477
  %v1660 = vunpack.c.l.b16 %v1478
  %v1661 = vunpack.c.h.b16 %v1478
  %v1662 = vunpack.c.l.b16 %v1479
  %v1663 = vunpack.c.h.b16 %v1479
  %v1664 = vunpack.c.l.b16 %v1480
  %v1665 = vunpack.c.h.b16 %v1480
  %v1666 = vunpack.c.l.b16 %v1481
  %v1667 = vunpack.c.h.b16 %v1481
  %v1668 = vunpack.c.l.b16 %v1482
  %v1669 = vunpack.c.h.b16 %v1482
  %v1670 = vunpack.c.l.b16 %v1483
  %v1671 = vunpack.c.h.b16 %v1483
  %v1672 = vunpack.c.l.b16 %v1484
  %v1673 = vunpack.c.h.b16 %v1484
  %v1674 = vunpack.c.l.b16 %v1485
  %v1675 = vunpack.c.h.b16 %v1485
  %v1676 = vunpack.c.l.b16 %v1486
  %v1677 = vunpack.c.h.b16 %v1486
  %v1678 = vunpack.c.l.b16 %v1487
  %v1679 = vunpack.c.h.b16 %v1487
  %v1680 = vunpack.c.l.b16 %v1488
  %v1681 = vunpack.c.h.b16 %v1488
  %v1682 = vunpack.c.l.b16 %v1489
  %v1683 = vunpack.c.h.b16 %v1489
  %v1684 = vunpack.c.l.b16 %v1490
  %v1685 = vunpack.c.h.b16 %v1490
  %v1686 = vunpack.c.l.b16 %v1491
  %v1687 = vunpack.c.h.b16 %v1491
  %v1688 = vunpack.c.l.b16 %v1492
  %v1689 = vunpack.c.h.b16 %v1492
  %v1690 = vunpack.c.l.b16 %v1493
  %v1691 = vunpack.c.h.b16 %v1493
  %v1692 = vunpack.c.l.b16 %v1494
  %v1693 = vunpack.c.h.b16 %v1494
  %v1694 = vunpack.c.l.b16 %v1495
  %v1695 = vunpack.c.h.b16 %v1495
  %v1696 = vunpack.c.l.b16 %v1496
  %v1697 = vunpack.c.h.b16 %v1496
  %v1698 = vunpack.c.l.b16 %v1497
  %v1699 = vunpack.c.h.b16 %v1497
  %v1700 = vunpack.c.l.b16 %v1498
  %v1701 = vunpack.c.h.b16 %v1498
  %v1702 = vunpack.c.l.b16 %v1499
  %v1703 = vunpack.c.h.b16 %v1499
  %v1704 = vunpack.c.l.b16 %v1500
  %v1705 = vunpack.c.h.b16 %v1500
  %v1706 = vunpack.c.l.b16 %v1501
  %v1707 = vunpack.c.h.b16 %v1501
  %v1708 = vunpack.c.l.b16 %v1502
  %v1709 = vunpack.c.h.b16 %v1502
  %v1710 = vunpack.c.l.b16 %v1503
  %v1711 = vunpack.c.h.b16 %v1503
  %v1712 = vunpack.c.l.b16 %v1504
  %v1713 = vunpack.c.h.b16 %v1504
  %v1714 = vunpack.c.l.b16 %v1505
  %v1715 = vunpack.c.h.b16 %v1505
  %v1716 = vunpack.c.l.b16 %v1506
  %v1717 = vunpack.c.h.b16 %v1506
  %v1718 = vunpack.c.l.b16 %v1507
  %v1719 = vunpack.c.h.b16 %v1507
  %v1720 = vunpack.c.l.b16 %v1508
  %v1721 = vunpack.c.h.b16 %v1508
  %v1722 = vunpack.c.l.b16 %v1509
  %v1723 = vunpack.c.h.b16 %v1509
  %v1724 = vpack.c.b16 %v1600, %v1596
  %v1725 = vpack.c.b16 %v1601, %v1597
  %v1726 = vpack.c.b16 %v1602, %v1598
  %v1727 = vpack.c.b16 %v1603, %v1599
  %v1728 = vpack.c.b16 %v1608, %v1604
  %v1729 = vpack.c.b16 %v1609, %v1605
  %v1730 = vpack.c.b16 %v1610, %v1606
  %v1731 = vpack.c.b16 %v1611, %v1607
  %v1732 = vpack.c.b16 %v1616, %v1612
  %v1733 = vpack.c.b16 %v1617, %v1613
  %v1734 = vpack.c.b16 %v1618, %v1614
  %v1735 = vpack.c.b16 %v1619, %v1615
  %v1736 = vpack.c.b16 %v1624, %v1620
  %v1737 = vpack.c.b16 %v1625, %v1621
  %v1738 = vpack.c.b16 %v1626, %v1622
  %v1739 = vpack.c.b16 %v1627, %v1623
  %v1740 = vpack.c.b16 %v1632, %v1628
  %v1741 = vpack.c.b16 %v1633, %v1629
  %v1742 = vpack.c.b16 %v1634, %v1630
  %v1743 = vpack.c.b16 %v1635, %v1631
  %v1744 = vpack.c.b16 %v1640, %v1636
  %v1745 = vpack.c.b16 %v1641, %v1637
  %v1746 = vpack.c.b16 %v1642, %v1638
  %v1747 = vpack.c.b16 %v1643, %v1639
  %v1748 = vpack.c.b16 %v1648, %v1644
  %v1749 = vpack.c.b16 %v1649, %v1645
  %v1750 = vpack.c.b16 %v1650, %v1646
  %v1751 = vpack.c.b16 %v1651, %v1647
  %v1752 = vpack.c.b16 %v1656, %v1652
  %v1753 = vpack.c.b16 %v1657, %v1653
  %v1754 = vpack.c.b16 %v1658, %v1654
  %v1755 = vpack.c.b16 %v1659, %v1655
  %v1756 = vpack.c.b16 %v1664, %v1660
  %v1757 = vpack.c.b16 %v1665, %v1661
  %v1758 = vpack.c.b16 %v1666, %v1662
  %v1759 = vpack.c.b16 %v1667, %v1663
  %v1760 = vpack.c.b16 %v1672, %v1668
  %v1761 = vpack.c.b16 %v1673, %v1669
  %v1762 = vpack.c.b16 %v1674, %v1670
  %v1763 = vpack.c.b16 %v1675, %v1671
  %v1764 = vpack.c.b16 %v1680, %v1676
  %v1765 = vpack.c.b16 %v1681, %v1677
  %v1766 = vpack.c.b16 %v1682, %v1678
  %v1767 = vpack.c.b16 %v1683, %v1679
  %v1768 = vpack.c.b16 %v1688, %v1684
  %v1769 = vpack.c.b16 %v1689, %v1685
  %v1770 = vpack.c.b16 %v1690, %v1686
  %v1771 = vpack.c.b16 %v1691, %v1687
  %v1772 = vpack.c.b16 %v1696, %v1692
  %v1773 = vpack.c.b16 %v1697, %v1693
  %v1774 = vpack.c.b16 %v1698, %v1694
  %v1775 = vpack.c.b16 %v1699, %v1695
  %v1776 = vpack.c.b16 %v1704, %v1700
  %v1777 = vpack.c.b16 %v1705, %v1701
  %v1778 = vpack.c.b16 %v1706, %v1702
  %v1779 = vpack.c.b16 %v1707, %v1703
  %v1780 = vpack.c.b16 %v1712, %v1708
  %v1781 = vpack.c.b16 %v1713, %v1709
  %v1782 = vpack.c.b16 %v1714, %v1710
  %v1783 = vpack.c.b16 %v1715, %v1711
  %v1784 = vpack.c.b16 %v1720, %v1716
  %v1785 = vpack.c.b16 %v1721, %v1717
  %v1786 = vpack.c.b16 %v1722, %v1718
  %v1787 = vpack.c.b16 %v1723, %v1719
  %1852 = vmatprep.subr.bf16.mxu0 %v1725
  %1853 = vmatpush1.bf16.msra.mxu0 %v1724
  %1854 = vmatprep.subr.bf16.mxu0 %v1729
  %1855 = vmatpush1.bf16.msra.mxu0 %v1728
  %1856 = vmatprep.subr.bf16.mxu0 %v1733
  %1857 = vmatpush1.bf16.msra.mxu0 %v1732
  %1858 = vmatprep.subr.bf16.mxu0 %v1737
  %1859 = vmatpush1.bf16.msra.mxu0 %v1736
  %1860 = vmatprep.subr.bf16.mxu0 %v1741
  %1861 = vmatpush1.bf16.msra.mxu0 %v1740
  %1862 = vmatprep.subr.bf16.mxu0 %v1745
  %1863 = vmatpush1.bf16.msra.mxu0 %v1744
  %1864 = vmatprep.subr.bf16.mxu0 %v1749
  %1865 = vmatpush1.bf16.msra.mxu0 %v1748
  %1866 = vmatprep.subr.bf16.mxu0 %v1753
  %1867 = vmatpush1.bf16.msra.mxu0 %v1752
  %1868 = vmatprep.subr.bf16.mxu0 %v1757
  %1869 = vmatpush1.bf16.msra.mxu0 %v1756
  %1870 = vmatprep.subr.bf16.mxu0 %v1761
  %1871 = vmatpush1.bf16.msra.mxu0 %v1760
  %1872 = vmatprep.subr.bf16.mxu0 %v1765
  %1873 = vmatpush1.bf16.msra.mxu0 %v1764
  %1874 = vmatprep.subr.bf16.mxu0 %v1769
  %1875 = vmatpush1.bf16.msra.mxu0 %v1768
  %1876 = vmatprep.subr.bf16.mxu0 %v1773
  %1877 = vmatpush1.bf16.msra.mxu0 %v1772
  %1878 = vmatprep.subr.bf16.mxu0 %v1777
  %1879 = vmatpush1.bf16.msra.mxu0 %v1776
  %1880 = vmatprep.subr.bf16.mxu0 %v1781
  %1881 = vmatpush1.bf16.msra.mxu0 %v1780
  %1882 = vmatprep.subr.bf16.mxu0 %v1785
  %1883 = vmatpush1.bf16.msra.mxu0 %v1784
  %1884 = vmatprep.mubr.bf16.mxu0 %v1445
  %1885 = vmatmul.mubr.bf16.gmra.mrb[0].mxu0 %v1444
  %v1886 = vpop.f32.mrb[0].mxu0
  %v1887 = vadd.f32 %v1515, %v1886
  %v1888 = vpop.f32.mrb[0].mxu0
  %v1889 = vadd.f32 %v1519, %v1888
  %v1890 = vpop.f32.mrb[0].mxu0
  %v1891 = vpop.f32.mrb[0].mxu0
  %1892 = vdwg.mxu0
  %1893 = vmatprep.subr.bf16.mxu0 %v1727
  %1894 = vmatpush1.bf16.msra.mxu0 %v1726
  %1895 = vmatprep.subr.bf16.mxu0 %v1731
  %1896 = vmatpush1.bf16.msra.mxu0 %v1730
  %1897 = vmatprep.subr.bf16.mxu0 %v1735
  %1898 = vmatpush1.bf16.msra.mxu0 %v1734
  %1899 = vmatprep.subr.bf16.mxu0 %v1739
  %1900 = vmatpush1.bf16.msra.mxu0 %v1738
  %1901 = vmatprep.subr.bf16.mxu0 %v1743
  %1902 = vmatpush1.bf16.msra.mxu0 %v1742
  %1903 = vmatprep.subr.bf16.mxu0 %v1747
  %1904 = vmatpush1.bf16.msra.mxu0 %v1746
  %1905 = vmatprep.subr.bf16.mxu0 %v1751
  %1906 = vmatpush1.bf16.msra.mxu0 %v1750
  %1907 = vmatprep.subr.bf16.mxu0 %v1755
  %1908 = vmatpush1.bf16.msra.mxu0 %v1754
  %1909 = vmatprep.subr.bf16.mxu0 %v1759
  %1910 = vmatpush1.bf16.msra.mxu0 %v1758
  %1911 = vmatprep.subr.bf16.mxu0 %v1763
  %1912 = vmatpush1.bf16.msra.mxu0 %v1762
  %1913 = vmatprep.subr.bf16.mxu0 %v1767
  %1914 = vmatpush1.bf16.msra.mxu0 %v1766
  %1915 = vmatprep.subr.bf16.mxu0 %v1771
  %1916 = vmatpush1.bf16.msra.mxu0 %v1770
  %1917 = vmatprep.subr.bf16.mxu0 %v1775
  %1918 = vmatpush1.bf16.msra.mxu0 %v1774
  %1919 = vmatprep.subr.bf16.mxu0 %v1779
  %1920 = vmatpush1.bf16.msra.mxu0 %v1778
  %1921 = vmatprep.subr.bf16.mxu0 %v1783
  %1922 = vmatpush1.bf16.msra.mxu0 %v1782
  %1923 = vmatprep.subr.bf16.mxu0 %v1787
  %1924 = vmatpush1.bf16.msra.mxu0 %v1786
  %1925 = vmatprep.mubr.bf16.mxu0 %v1445
  %1926 = vmatmul.mubr.bf16.gmra.mrb[0].mxu0 %v1444
  %v1927 = vpop.f32.mrb[0].mxu0
  %v1928 = vadd.f32 %v1523, %v1927
  %v1929 = vpop.f32.mrb[0].mxu0
  %v1930 = vadd.f32 %v1527, %v1929
  %v1931 = vpop.f32.mrb[0].mxu0
  %v1932 = vpop.f32.mrb[0].mxu0
  %1933 = vdwg.mxu0
  %vm1934 = vcmp.gt.f32.partialorder %v1887, 0.0
  %vm1935 = vcmp.gt.f32.partialorder %v1889, 0.0
  %vm1936 = vcmp.gt.f32.partialorder %v1928, 0.0
  %vm1937 = vcmp.gt.f32.partialorder %v1930, 0.0
  %v1938 = vmul.f32 %v1887, 0.2
  %v1939 = vmul.f32 %v1889, 0.2
  %v1940 = vmul.f32 %v1928, 0.2
  %v1941 = vmul.f32 %v1930, 0.2
  %v1942 = vsel %vm1934, %v1887, %v1938
  %v1943 = vsel %vm1935, %v1889, %v1939
  %v1944 = vsel %vm1936, %v1928, %v1940
  %v1945 = vsel %vm1937, %v1930, %v1941
  %v1946 = vpack.c.bf16 %v1942, %v1942
  %v1947 = vpack.c.bf16 %v1943, %v1943
  %v1948 = vpack.c.bf16 %v1944, %v1944
  %v1949 = vpack.c.bf16 %v1945, %v1945
  %v1950 = vld [vmem:[%s11] sm:$0xff]
  %v1951 = vld [vmem:[%s11 + $0x8] sm:$0xff]
  %v1952 = vld [vmem:[%s11 + $0x10] sm:$0xff]
  %v1953 = vld [vmem:[%s11 + $0x18] sm:$0xff]
  %v1954 = vld [vmem:[%s11 + $0x20] sm:$0xff]
  %v1955 = vld [vmem:[%s11 + $0x28] sm:$0xff]
  %v1956 = vld [vmem:[%s11 + $0x30] sm:$0xff]
  %v1957 = vld [vmem:[%s11 + $0x38] sm:$0xff]
  %v1958 = vld [vmem:[%s11 + $0x40] sm:$0xff]
  %v1959 = vld [vmem:[%s11 + $0x48] sm:$0xff]
  %v1960 = vld [vmem:[%s11 + $0x50] sm:$0xff]
  %v1961 = vld [vmem:[%s11 + $0x58] sm:$0xff]
  %v1962 = vld [vmem:[%s11 + $0x60] sm:$0xff]
  %v1963 = vld [vmem:[%s11 + $0x68] sm:$0xff]
  %v1964 = vld [vmem:[%s11 + $0x70] sm:$0xff]
  %v1965 = vld [vmem:[%s11 + $0x78] sm:$0xff]
  %v1966 = vld [vmem:[%s11 + $0x80] sm:$0xff]
  %v1967 = vld [vmem:[%s11 + $0x88] sm:$0xff]
  %v1968 = vld [vmem:[%s11 + $0x90] sm:$0xff]
  %v1969 = vld [vmem:[%s11 + $0x98] sm:$0xff]
  %v1970 = vld [vmem:[%s11 + $0xa0] sm:$0xff]
  %v1971 = vld [vmem:[%s11 + $0xa8] sm:$0xff]
  %v1972 = vld [vmem:[%s11 + $0xb0] sm:$0xff]
  %v1973 = vld [vmem:[%s11 + $0xb8] sm:$0xff]
  %v1974 = vld [vmem:[%s11 + $0xc0] sm:$0xff]
  %v1975 = vld [vmem:[%s11 + $0xc8] sm:$0xff]
  %v1976 = vld [vmem:[%s11 + $0xd0] sm:$0xff]
  %v1977 = vld [vmem:[%s11 + $0xd8] sm:$0xff]
  %v1978 = vld [vmem:[%s11 + $0xe0] sm:$0xff]
  %v1979 = vld [vmem:[%s11 + $0xe8] sm:$0xff]
  %v1980 = vld [vmem:[%s11 + $0xf0] sm:$0xff]
  %v1981 = vld [vmem:[%s11 + $0xf8] sm:$0xff]
  %v1982 = vld [vmem:[%s11 + $0x100] sm:$0xff]
  %v1983 = vld [vmem:[%s11 + $0x108] sm:$0xff]
  %v1984 = vld [vmem:[%s11 + $0x110] sm:$0xff]
  %v1985 = vld [vmem:[%s11 + $0x118] sm:$0xff]
  %v1986 = vld [vmem:[%s11 + $0x120] sm:$0xff]
  %v1987 = vld [vmem:[%s11 + $0x128] sm:$0xff]
  %v1988 = vld [vmem:[%s11 + $0x130] sm:$0xff]
  %v1989 = vld [vmem:[%s11 + $0x138] sm:$0xff]
  %v1990 = vld [vmem:[%s11 + $0x140] sm:$0xff]
  %v1991 = vld [vmem:[%s11 + $0x148] sm:$0xff]
  %v1992 = vld [vmem:[%s11 + $0x150] sm:$0xff]
  %v1993 = vld [vmem:[%s11 + $0x158] sm:$0xff]
  %v1994 = vld [vmem:[%s11 + $0x160] sm:$0xff]
  %v1995 = vld [vmem:[%s11 + $0x168] sm:$0xff]
  %v1996 = vld [vmem:[%s11 + $0x170] sm:$0xff]
  %v1997 = vld [vmem:[%s11 + $0x178] sm:$0xff]
  %v1998 = vld [vmem:[%s11 + $0x180] sm:$0xff]
  %v1999 = vld [vmem:[%s11 + $0x188] sm:$0xff]
  %v2000 = vld [vmem:[%s11 + $0x190] sm:$0xff]
  %v2001 = vld [vmem:[%s11 + $0x198] sm:$0xff]
  %v2002 = vld [vmem:[%s11 + $0x1a0] sm:$0xff]
  %v2003 = vld [vmem:[%s11 + $0x1a8] sm:$0xff]
  %v2004 = vld [vmem:[%s11 + $0x1b0] sm:$0xff]
  %v2005 = vld [vmem:[%s11 + $0x1b8] sm:$0xff]
  %v2006 = vld [vmem:[%s11 + $0x1c0] sm:$0xff]
  %v2007 = vld [vmem:[%s11 + $0x1c8] sm:$0xff]
  %v2008 = vld [vmem:[%s11 + $0x1d0] sm:$0xff]
  %v2009 = vld [vmem:[%s11 + $0x1d8] sm:$0xff]
  %v2010 = vld [vmem:[%s11 + $0x1e0] sm:$0xff]
  %v2011 = vld [vmem:[%s11 + $0x1e8] sm:$0xff]
  %v2012 = vld [vmem:[%s11 + $0x1f0] sm:$0xff]
  %v2013 = vld [vmem:[%s11 + $0x1f8] sm:$0xff]
  %v2014 = vld [vmem:[%s12] sm:$0x3]
  %v2016 = vlaneseq
  %v2017 = vshrl.u32 %v2016, 7
  %v2018 = vsub.s32 0, %v2017
  %v2019 = vrot.slane %v2014, %v2018
  %v2020 = vlaneseq
  %v2021 = vshrl.u32 %v2020, 7
  %v2022 = vsub.s32 1, %v2021
  %v2023 = vrot.slane %v2014, %v2022
  %v2090 = vunpack.c.l.b16 %v1950
  %v2091 = vunpack.c.h.b16 %v1950
  %v2092 = vunpack.c.l.b16 %v1951
  %v2093 = vunpack.c.h.b16 %v1951
  %v2094 = vunpack.c.l.b16 %v1952
  %v2095 = vunpack.c.h.b16 %v1952
  %v2096 = vunpack.c.l.b16 %v1953
  %v2097 = vunpack.c.h.b16 %v1953
  %v2098 = vunpack.c.l.b16 %v1954
  %v2099 = vunpack.c.h.b16 %v1954
  %v2100 = vunpack.c.l.b16 %v1955
  %v2101 = vunpack.c.h.b16 %v1955
  %v2102 = vunpack.c.l.b16 %v1956
  %v2103 = vunpack.c.h.b16 %v1956
  %v2104 = vunpack.c.l.b16 %v1957
  %v2105 = vunpack.c.h.b16 %v1957
  %v2106 = vunpack.c.l.b16 %v1958
  %v2107 = vunpack.c.h.b16 %v1958
  %v2108 = vunpack.c.l.b16 %v1959
  %v2109 = vunpack.c.h.b16 %v1959
  %v2110 = vunpack.c.l.b16 %v1960
  %v2111 = vunpack.c.h.b16 %v1960
  %v2112 = vunpack.c.l.b16 %v1961
  %v2113 = vunpack.c.h.b16 %v1961
  %v2114 = vunpack.c.l.b16 %v1962
  %v2115 = vunpack.c.h.b16 %v1962
  %v2116 = vunpack.c.l.b16 %v1963
  %v2117 = vunpack.c.h.b16 %v1963
  %v2118 = vunpack.c.l.b16 %v1964
  %v2119 = vunpack.c.h.b16 %v1964
  %v2120 = vunpack.c.l.b16 %v1965
  %v2121 = vunpack.c.h.b16 %v1965
  %v2122 = vunpack.c.l.b16 %v1966
  %v2123 = vunpack.c.h.b16 %v1966
  %v2124 = vunpack.c.l.b16 %v1967
  %v2125 = vunpack.c.h.b16 %v1967
  %v2126 = vunpack.c.l.b16 %v1968
  %v2127 = vunpack.c.h.b16 %v1968
  %v2128 = vunpack.c.l.b16 %v1969
  %v2129 = vunpack.c.h.b16 %v1969
  %v2130 = vunpack.c.l.b16 %v1970
  %v2131 = vunpack.c.h.b16 %v1970
  %v2132 = vunpack.c.l.b16 %v1971
  %v2133 = vunpack.c.h.b16 %v1971
  %v2134 = vunpack.c.l.b16 %v1972
  %v2135 = vunpack.c.h.b16 %v1972
  %v2136 = vunpack.c.l.b16 %v1973
  %v2137 = vunpack.c.h.b16 %v1973
  %v2138 = vunpack.c.l.b16 %v1974
  %v2139 = vunpack.c.h.b16 %v1974
  %v2140 = vunpack.c.l.b16 %v1975
  %v2141 = vunpack.c.h.b16 %v1975
  %v2142 = vunpack.c.l.b16 %v1976
  %v2143 = vunpack.c.h.b16 %v1976
  %v2144 = vunpack.c.l.b16 %v1977
  %v2145 = vunpack.c.h.b16 %v1977
  %v2146 = vunpack.c.l.b16 %v1978
  %v2147 = vunpack.c.h.b16 %v1978
  %v2148 = vunpack.c.l.b16 %v1979
  %v2149 = vunpack.c.h.b16 %v1979
  %v2150 = vunpack.c.l.b16 %v1980
  %v2151 = vunpack.c.h.b16 %v1980
  %v2152 = vunpack.c.l.b16 %v1981
  %v2153 = vunpack.c.h.b16 %v1981
  %v2154 = vunpack.c.l.b16 %v1982
  %v2155 = vunpack.c.h.b16 %v1982
  %v2156 = vunpack.c.l.b16 %v1983
  %v2157 = vunpack.c.h.b16 %v1983
  %v2158 = vunpack.c.l.b16 %v1984
  %v2159 = vunpack.c.h.b16 %v1984
  %v2160 = vunpack.c.l.b16 %v1985
  %v2161 = vunpack.c.h.b16 %v1985
  %v2162 = vunpack.c.l.b16 %v1986
  %v2163 = vunpack.c.h.b16 %v1986
  %v2164 = vunpack.c.l.b16 %v1987
  %v2165 = vunpack.c.h.b16 %v1987
  %v2166 = vunpack.c.l.b16 %v1988
  %v2167 = vunpack.c.h.b16 %v1988
  %v2168 = vunpack.c.l.b16 %v1989
  %v2169 = vunpack.c.h.b16 %v1989
  %v2170 = vunpack.c.l.b16 %v1990
  %v2171 = vunpack.c.h.b16 %v1990
  %v2172 = vunpack.c.l.b16 %v1991
  %v2173 = vunpack.c.h.b16 %v1991
  %v2174 = vunpack.c.l.b16 %v1992
  %v2175 = vunpack.c.h.b16 %v1992
  %v2176 = vunpack.c.l.b16 %v1993
  %v2177 = vunpack.c.h.b16 %v1993
  %v2178 = vunpack.c.l.b16 %v1994
  %v2179 = vunpack.c.h.b16 %v1994
  %v2180 = vunpack.c.l.b16 %v1995
  %v2181 = vunpack.c.h.b16 %v1995
  %v2182 = vunpack.c.l.b16 %v1996
  %v2183 = vunpack.c.h.b16 %v1996
  %v2184 = vunpack.c.l.b16 %v1997
  %v2185 = vunpack.c.h.b16 %v1997
  %v2186 = vunpack.c.l.b16 %v1998
  %v2187 = vunpack.c.h.b16 %v1998
  %v2188 = vunpack.c.l.b16 %v1999
  %v2189 = vunpack.c.h.b16 %v1999
  %v2190 = vunpack.c.l.b16 %v2000
  %v2191 = vunpack.c.h.b16 %v2000
  %v2192 = vunpack.c.l.b16 %v2001
  %v2193 = vunpack.c.h.b16 %v2001
  %v2194 = vunpack.c.l.b16 %v2002
  %v2195 = vunpack.c.h.b16 %v2002
  %v2196 = vunpack.c.l.b16 %v2003
  %v2197 = vunpack.c.h.b16 %v2003
  %v2198 = vunpack.c.l.b16 %v2004
  %v2199 = vunpack.c.h.b16 %v2004
  %v2200 = vunpack.c.l.b16 %v2005
  %v2201 = vunpack.c.h.b16 %v2005
  %v2202 = vunpack.c.l.b16 %v2006
  %v2203 = vunpack.c.h.b16 %v2006
  %v2204 = vunpack.c.l.b16 %v2007
  %v2205 = vunpack.c.h.b16 %v2007
  %v2206 = vunpack.c.l.b16 %v2008
  %v2207 = vunpack.c.h.b16 %v2008
  %v2208 = vunpack.c.l.b16 %v2009
  %v2209 = vunpack.c.h.b16 %v2009
  %v2210 = vunpack.c.l.b16 %v2010
  %v2211 = vunpack.c.h.b16 %v2010
  %v2212 = vunpack.c.l.b16 %v2011
  %v2213 = vunpack.c.h.b16 %v2011
  %v2214 = vunpack.c.l.b16 %v2012
  %v2215 = vunpack.c.h.b16 %v2012
  %v2216 = vunpack.c.l.b16 %v2013
  %v2217 = vunpack.c.h.b16 %v2013
  %v2218 = vpack.c.b16 %v2092, %v2090
  %v2219 = vpack.c.b16 %v2093, %v2091
  %v2220 = vpack.c.b16 %v2096, %v2094
  %v2221 = vpack.c.b16 %v2097, %v2095
  %v2222 = vpack.c.b16 %v2100, %v2098
  %v2223 = vpack.c.b16 %v2101, %v2099
  %v2224 = vpack.c.b16 %v2104, %v2102
  %v2225 = vpack.c.b16 %v2105, %v2103
  %v2226 = vpack.c.b16 %v2108, %v2106
  %v2227 = vpack.c.b16 %v2109, %v2107
  %v2228 = vpack.c.b16 %v2112, %v2110
  %v2229 = vpack.c.b16 %v2113, %v2111
  %v2230 = vpack.c.b16 %v2116, %v2114
  %v2231 = vpack.c.b16 %v2117, %v2115
  %v2232 = vpack.c.b16 %v2120, %v2118
  %v2233 = vpack.c.b16 %v2121, %v2119
  %v2234 = vpack.c.b16 %v2124, %v2122
  %v2235 = vpack.c.b16 %v2125, %v2123
  %v2236 = vpack.c.b16 %v2128, %v2126
  %v2237 = vpack.c.b16 %v2129, %v2127
  %v2238 = vpack.c.b16 %v2132, %v2130
  %v2239 = vpack.c.b16 %v2133, %v2131
  %v2240 = vpack.c.b16 %v2136, %v2134
  %v2241 = vpack.c.b16 %v2137, %v2135
  %v2242 = vpack.c.b16 %v2140, %v2138
  %v2243 = vpack.c.b16 %v2141, %v2139
  %v2244 = vpack.c.b16 %v2144, %v2142
  %v2245 = vpack.c.b16 %v2145, %v2143
  %v2246 = vpack.c.b16 %v2148, %v2146
  %v2247 = vpack.c.b16 %v2149, %v2147
  %v2248 = vpack.c.b16 %v2152, %v2150
  %v2249 = vpack.c.b16 %v2153, %v2151
  %v2250 = vpack.c.b16 %v2156, %v2154
  %v2251 = vpack.c.b16 %v2157, %v2155
  %v2252 = vpack.c.b16 %v2160, %v2158
  %v2253 = vpack.c.b16 %v2161, %v2159
  %v2254 = vpack.c.b16 %v2164, %v2162
  %v2255 = vpack.c.b16 %v2165, %v2163
  %v2256 = vpack.c.b16 %v2168, %v2166
  %v2257 = vpack.c.b16 %v2169, %v2167
  %v2258 = vpack.c.b16 %v2172, %v2170
  %v2259 = vpack.c.b16 %v2173, %v2171
  %v2260 = vpack.c.b16 %v2176, %v2174
  %v2261 = vpack.c.b16 %v2177, %v2175
  %v2262 = vpack.c.b16 %v2180, %v2178
  %v2263 = vpack.c.b16 %v2181, %v2179
  %v2264 = vpack.c.b16 %v2184, %v2182
  %v2265 = vpack.c.b16 %v2185, %v2183
  %v2266 = vpack.c.b16 %v2188, %v2186
  %v2267 = vpack.c.b16 %v2189, %v2187
  %v2268 = vpack.c.b16 %v2192, %v2190
  %v2269 = vpack.c.b16 %v2193, %v2191
  %v2270 = vpack.c.b16 %v2196, %v2194
  %v2271 = vpack.c.b16 %v2197, %v2195
  %v2272 = vpack.c.b16 %v2200, %v2198
  %v2273 = vpack.c.b16 %v2201, %v2199
  %v2274 = vpack.c.b16 %v2204, %v2202
  %v2275 = vpack.c.b16 %v2205, %v2203
  %v2276 = vpack.c.b16 %v2208, %v2206
  %v2277 = vpack.c.b16 %v2209, %v2207
  %v2278 = vpack.c.b16 %v2212, %v2210
  %v2279 = vpack.c.b16 %v2213, %v2211
  %v2280 = vpack.c.b16 %v2216, %v2214
  %v2281 = vpack.c.b16 %v2217, %v2215
  %2346 = vmatprep.subr.bf16.mxu0 %v2219
  %2347 = vmatpush1.bf16.msra.mxu0 %v2218
  %2348 = vmatprep.subr.bf16.mxu0 %v2221
  %2349 = vmatpush1.bf16.msra.mxu0 %v2220
  %2350 = vmatprep.subr.bf16.mxu0 %v2223
  %2351 = vmatpush1.bf16.msra.mxu0 %v2222
  %2352 = vmatprep.subr.bf16.mxu0 %v2225
  %2353 = vmatpush1.bf16.msra.mxu0 %v2224
  %2354 = vmatprep.subr.bf16.mxu0 %v2227
  %2355 = vmatpush1.bf16.msra.mxu0 %v2226
  %2356 = vmatprep.subr.bf16.mxu0 %v2229
  %2357 = vmatpush1.bf16.msra.mxu0 %v2228
  %2358 = vmatprep.subr.bf16.mxu0 %v2231
  %2359 = vmatpush1.bf16.msra.mxu0 %v2230
  %2360 = vmatprep.subr.bf16.mxu0 %v2233
  %2361 = vmatpush1.bf16.msra.mxu0 %v2232
  %2362 = vmatprep.subr.bf16.mxu0 %v2235
  %2363 = vmatpush1.bf16.msra.mxu0 %v2234
  %2364 = vmatprep.subr.bf16.mxu0 %v2237
  %2365 = vmatpush1.bf16.msra.mxu0 %v2236
  %2366 = vmatprep.subr.bf16.mxu0 %v2239
  %2367 = vmatpush1.bf16.msra.mxu0 %v2238
  %2368 = vmatprep.subr.bf16.mxu0 %v2241
  %2369 = vmatpush1.bf16.msra.mxu0 %v2240
  %2370 = vmatprep.subr.bf16.mxu0 %v2243
  %2371 = vmatpush1.bf16.msra.mxu0 %v2242
  %2372 = vmatprep.subr.bf16.mxu0 %v2245
  %2373 = vmatpush1.bf16.msra.mxu0 %v2244
  %2374 = vmatprep.subr.bf16.mxu0 %v2247
  %2375 = vmatpush1.bf16.msra.mxu0 %v2246
  %2376 = vmatprep.subr.bf16.mxu0 %v2249
  %2377 = vmatpush1.bf16.msra.mxu0 %v2248
  %2378 = vmatprep.mubr.bf16.mxu0 %v1947
  %2379 = vmatmul.mubr.bf16.gmra.mrb[0].mxu0 %v1946
  %v2380 = vpop.f32.mrb[0].mxu0
  %v2381 = vadd.f32 %v2019, %v2380
  %v2382 = vpop.f32.mrb[0].mxu0
  %v2383 = vadd.f32 %v2023, %v2382
  %v2384 = vpop.f32.mrb[0].mxu0
  %v2385 = vpop.f32.mrb[0].mxu0
  %2386 = vdwg.mxu0
  %2387 = vmatprep.subr.bf16.mxu0 %v2251
  %2388 = vmatpush1.bf16.msra.mxu0 %v2250
  %2389 = vmatprep.subr.bf16.mxu0 %v2253
  %2390 = vmatpush1.bf16.msra.mxu0 %v2252
  %2391 = vmatprep.subr.bf16.mxu0 %v2255
  %2392 = vmatpush1.bf16.msra.mxu0 %v2254
  %2393 = vmatprep.subr.bf16.mxu0 %v2257
  %2394 = vmatpush1.bf16.msra.mxu0 %v2256
  %2395 = vmatprep.subr.bf16.mxu0 %v2259
  %2396 = vmatpush1.bf16.msra.mxu0 %v2258
  %2397 = vmatprep.subr.bf16.mxu0 %v2261
  %2398 = vmatpush1.bf16.msra.mxu0 %v2260
  %2399 = vmatprep.subr.bf16.mxu0 %v2263
  %2400 = vmatpush1.bf16.msra.mxu0 %v2262
  %2401 = vmatprep.subr.bf16.mxu0 %v2265
  %2402 = vmatpush1.bf16.msra.mxu0 %v2264
  %2403 = vmatprep.subr.bf16.mxu0 %v2267
  %2404 = vmatpush1.bf16.msra.mxu0 %v2266
  %2405 = vmatprep.subr.bf16.mxu0 %v2269
  %2406 = vmatpush1.bf16.msra.mxu0 %v2268
  %2407 = vmatprep.subr.bf16.mxu0 %v2271
  %2408 = vmatpush1.bf16.msra.mxu0 %v2270
  %2409 = vmatprep.subr.bf16.mxu0 %v2273
  %2410 = vmatpush1.bf16.msra.mxu0 %v2272
  %2411 = vmatprep.subr.bf16.mxu0 %v2275
  %2412 = vmatpush1.bf16.msra.mxu0 %v2274
  %2413 = vmatprep.subr.bf16.mxu0 %v2277
  %2414 = vmatpush1.bf16.msra.mxu0 %v2276
  %2415 = vmatprep.subr.bf16.mxu0 %v2279
  %2416 = vmatpush1.bf16.msra.mxu0 %v2278
  %2417 = vmatprep.subr.bf16.mxu0 %v2281
  %2418 = vmatpush1.bf16.msra.mxu0 %v2280
  %2419 = vmatprep.mubr.bf16.mxu0 %v1949
  %2420 = vmatmul.mubr.bf16.gmra.mrb[0].mxu0 %v1948
  %v2421 = vpop.f32.mrb[0].mxu0
  %v2422 = vadd.f32 %v2381, %v2421
  %v2423 = vpop.f32.mrb[0].mxu0
  %v2424 = vadd.f32 %v2383, %v2423
  %v2425 = vpop.f32.mrb[0].mxu0
  %v2426 = vpop.f32.mrb[0].mxu0
  %2427 = vdwg.mxu0
  %2428 = vst [vmem:[%s14] sm:$0xff] %v2422
  %2429 = vst [vmem:[%s14 + $0x8] sm:$0xff] %v2424
  // Predicated region
  $region54: #{discriminator_with_autoencoder.1} parent=0 // pred_check
    _
  $region55: #{discriminator_with_autoencoder.1} parent=0 // pred_check_branch
    %2431 = sbr.rel (0) target = $region57
  $region56: #{discriminator_with_autoencoder.1} parent=0 // pred_region
    _
  $region57: #{discriminator_with_autoencoder.1} parent=0 // pred_fallthru
    _
  // Predicated region
  $region58: #{discriminator_with_autoencoder.1} parent=0 // pred_check
    _
  $region59: #{discriminator_with_autoencoder.1} parent=0 // pred_check_branch
    %2433 = sbr.rel (0) target = $region61
  $region60: #{discriminator_with_autoencoder.1} parent=0 // pred_region
    _
  $region61: #{discriminator_with_autoencoder.1} parent=0 // pred_fallthru
    _
  // Predicated region
  $region62: #{discriminator_with_autoencoder.1} parent=0 // pred_check
    _
  $region63: #{discriminator_with_autoencoder.1} parent=0 // pred_check_branch
    %2435 = sbr.rel (0) target = $region65
  $region64: #{discriminator_with_autoencoder.1} parent=0 // pred_region
    _
  $region65: #{discriminator_with_autoencoder.1} parent=0 // pred_fallthru
    _
  // Predicated region
  $region66: #{discriminator_with_autoencoder.1} parent=0 // pred_check
    _
  $region67: #{discriminator_with_autoencoder.1} parent=0 // pred_check_branch
    %2437 = sbr.rel (0) target = $region69
  $region68: #{discriminator_with_autoencoder.1} parent=0 // pred_region
    _
  $region69: #{discriminator_with_autoencoder.1} parent=0 // pred_fallthru
    _

</llo_original>
